<compile_context>
chip_gen: v7x
topology: tpu7x:2x2x1
jax: 0.10.0
libtpu: 0.0.40
codegen_flags: <defaults>
</compile_context>

<pallas_src>
import functools

import jax
import jax.numpy as jnp
import numpy as np
from jax import lax
from jax.experimental import pallas as pl
from jax.experimental.pallas import tpu as pltpu  # noqa: F401  (no TPU-specific APIs needed)


def _round_up(x, m):
    return ((x + m - 1) // m) * m


# --------------------------- fused forward Pallas kernel ---------------------------
def _make_fused_kernel(B, Bp, T, HPT, compute_dtype):
    """Build the fused kernel for static (B, Bp, T, HPT, compute dtype)."""
    f32 = jnp.float32

    def kernel(x_ref, wih_ref, whh_ref, b_ref, w1_ref, b1_ref, w2_ref, b2_ref, o_ref):
        # ---- single packed input projection for all 4 chains / all gates ----
        #   (T*Bp, D_total) @ (D_total, 4*HPT), bf16 operands, f32 accumulation.
        gin = jnp.dot(x_ref[...], wih_ref[...], preferred_element_type=f32) + b_ref[...]

        whh = whh_ref[...]                      # (HPT, 4*HPT), block-diagonal per chain/gate
        h = jnp.zeros((Bp, HPT), f32)
        c = jnp.zeros((Bp, HPT), f32)

        # ---- single fused recurrence for 3 LF chains + EF chain ----
        # T is a small trace-time constant -> static unroll (full LLO visibility).
        # TODO(synk): for T >> 8 switch to lax.fori_loop / a grid axis over T with h,c in
        #             VMEM scratch and gin tiles pipelined via BlockSpec.
        for t in range(T):
            # 8-sublane-aligned, full-vreg slab; gate slices below are 128-lane aligned.
            gates = gin[t * Bp:(t + 1) * Bp, :] + jnp.dot(
                h.astype(compute_dtype), whh, preferred_element_type=f32)
            i_g = jax.nn.sigmoid(gates[:, 0 * HPT:1 * HPT])
            f_g = jax.nn.sigmoid(gates[:, 1 * HPT:2 * HPT])
            g_g = jnp.tanh(gates[:, 2 * HPT:3 * HPT])
            o_g = jax.nn.sigmoid(gates[:, 3 * HPT:4 * HPT])
            c = f_g * c + i_g * g_g
            h = o_g * jnp.tanh(c)

        # ---- MLP head on the packed final state (padded lanes are exactly 0) ----
        hid = jnp.dot(h.astype(compute_dtype), w1_ref[...],
                      preferred_element_type=f32) + b1_ref[...]
        hid = jnp.maximum(hid, 0.0)             # ReLU; Dropout(0.1) is identity at eval
        out = jnp.dot(hid.astype(compute_dtype), w2_ref[...],
                      preferred_element_type=f32) + b2_ref[...]
        o_ref[...] = out[:B, :].astype(o_ref.dtype)

    return kernel


def ef_lf_rnn_forward(kparams, x_text, x_audio, x_vision):
    """Fused forward pass. kparams = prepare_params(raw_params). x_*: (B, T, D_m) f32."""
    B, T, _ = x_text.shape
    cdt = kparams["compute_dtype"]
    HPT = kparams["whh"].shape[0]
    C = kparams["w2"].shape[1]
    Bp = _round_up(B, 8)                        # pad batch to full f32 sublane tile

    # Per-call glue: concat modalities (needed for the single packed projection),
    # time-major transpose, pad batch to 8 sublanes, flatten (row r = t*Bp + b).
    x = jnp.concatenate([x_text, x_audio, x_vision], axis=-1)   # (B, T, D)
    x = jnp.transpose(x, (1, 0, 2))                              # (T, B, D)
    x = jnp.pad(x, ((0, 0), (0, Bp - B), (0, 0)))                # (T, Bp, D)
    x = x.reshape(T * Bp, x.shape[-1]).astype(cdt)

    kernel = _make_fused_kernel(B=B, Bp=Bp, T=T, HPT=HPT, compute_dtype=cdt)

    # Whole working set is a few hundred KB -> no grid, no tiling; everything stays in
    # VMEM for the single kernel invocation (fits v5e/v6e/v7x with huge headroom).
    return pl.pallas_call(
        kernel,
        out_shape=jax.ShapeDtypeStruct((B, C), jnp.float32),
    )(
        x,
        kparams["wih"], kparams["whh"], kparams["b"],
        kparams["w1"], kparams["b1"], kparams["w2"], kparams["b2"],
    )


# ------------------------------ parameter construction ------------------------------
def init_lstm_params(key, input_size, hidden_size):
    """PyTorch-layout LSTM params: w_ih (4H, D), w_hh (4H, H), b_ih/b_hh (4H,)."""
    k = 1.0 / np.sqrt(hidden_size)
    k1, k2, k3, k4 = jax.random.split(key, 4)
    return dict(
        w_ih=jax.random.uniform(k1, (4 * hidden_size, input_size), jnp.float32, -k, k),
        w_hh=jax.random.uniform(k2, (4 * hidden_size, hidden_size), jnp.float32, -k, k),
        b_ih=jax.random.uniform(k3, (4 * hidden_size,), jnp.float32, -k, k),
        b_hh=jax.random.uniform(k4, (4 * hidden_size,), jnp.float32, -k, k),
    )


def init_model(key, num_classes, input_sizes, hidden_size, hidden_sizes):
    keys = jax.random.split(key, 8)
    params = {
        "ef": init_lstm_params(keys[0], sum(input_sizes), hidden_size),
        "lf": [
            init_lstm_params(keys[1 + i], input_sizes[i], hidden_sizes[i])
            for i in range(len(input_sizes))
        ],
    }
    lin_in = hidden_size + sum(hidden_sizes)
    lin_mid = lin_in // 2
    kw1, kb1, kw2, kb2 = jax.random.split(keys[7], 4)
    s1, s2 = 1.0 / np.sqrt(lin_in), 1.0 / np.sqrt(lin_mid)
    params["head"] = dict(
        w1=jax.random.uniform(kw1, (lin_in, lin_mid), jnp.float32, -s1, s1),
        b1=jax.random.uniform(kb1, (lin_mid,), jnp.float32, -s1, s1),
        w2=jax.random.uniform(kw2, (lin_mid, num_classes), jnp.float32, -s2, s2),
        b2=jax.random.uniform(kb2, (num_classes,), jnp.float32, -s2, s2),
    )
    return params


def prepare_params(params, input_sizes, compute_dtype=jnp.bfloat16):
    """One-time packing of PyTorch-layout params into the fused-chain kernel layout.

    Lane layout of the fused hidden state (width HPT = round_up(sum H, 128)):
        [ h_text | h_audio | h_vision | h_fused | zero padding ]
    Gate layout of the packed 4*HPT gate vector: [ i | f | g | o ], each HPT wide, so gate
    slices are 128-lane aligned.  Padded lanes get zero weights AND zero bias so h,c stay
    exactly 0 there.  Matmul operand dtype = compute_dtype (bf16 by default); biases f32.
    """
    lf, ef, hd = params["lf"], params["ef"], params["head"]
    Hs = [int(p["w_hh"].shape[1]) for p in lf] + [int(ef["w_hh"].shape[1])]
    Ds = [int(d) for d in input_sizes]
    D_total = sum(Ds)
    H_sum = sum(Hs)
    HPT = _round_up(H_sum, 128)
    hoff = np.concatenate([[0], np.cumsum(Hs)])      # chain lane offsets in each gate block
    doff = np.concatenate([[0], np.cumsum(Ds)])      # modality row offsets in concat(x)

    wih = np.zeros((D_total, 4 * HPT), np.float32)
    whh = np.zeros((HPT, 4 * HPT), np.float32)
    bias = np.zeros((1, 4 * HPT), np.float32)

    def place(chain, p, row0, row1):
        H = Hs[chain]
        w_ih = np.asarray(p["w_ih"], np.float32)
        w_hh = np.asarray(p["w_hh"], np.float32)
        b_sum = np.asarray(p["b_ih"], np.float32) + np.asarray(p["b_hh"], np.float32)
        for g in range(4):                            # PyTorch gate order: i, f, g, o
            c0 = g * HPT + int(hoff[chain])
            wih[row0:row1, c0:c0 + H] = w_ih[g * H:(g + 1) * H, :].T
            whh[int(hoff[chain]):int(hoff[chain]) + H, c0:c0 + H] = w_hh[g * H:(g + 1) * H, :].T
            bias[0, c0:c0 + H] = b_sum[g * H:(g + 1) * H]

    for m in range(3):                                # LF chains: only their modality rows
        place(m, lf[m], int(doff[m]), int(doff[m + 1]))
    place(3, ef, 0, D_total)                          # EF chain: all concat(x) rows

    # Head: packed h lane order == torch.cat((text, audio, vision, fused)) order, so w1
    # only needs zero rows appended for the padded lanes (which are exactly 0 anyway).
    w1_full = np.asarray(hd["w1"], np.float32)
    lin_mid = w1_full.shape[1]
    w1 = np.zeros((HPT, lin_mid), np.float32)
    w1[:H_sum, :] = w1_full

    return dict(
        wih=jnp.asarray(wih, dtype=compute_dtype),
        whh=jnp.asarray(whh, dtype=compute_dtype),
        b=jnp.asarray(bias, dtype=jnp.float32),
        w1=jnp.asarray(w1, dtype=compute_dtype),
        b1=jnp.asarray(np.asarray(hd["b1"], np.float32).reshape(1, -1), dtype=jnp.float32),
        w2=jnp.asarray(np.asarray(hd["w2"], np.float32), dtype=compute_dtype),
        b2=jnp.asarray(np.asarray(hd["b2"], np.float32).reshape(1, -1), dtype=jnp.float32),
        compute_dtype=compute_dtype,
        hidden_sizes=tuple(Hs),
        input_sizes=tuple(Ds),
    )


# ----------------------------- pure-JAX reference check -----------------------------
def _lstm_ref(x_btd, w_ih, w_hh, b_ih, b_hh):
    B, T, D = x_btd.shape
    H = w_ih.shape[0] // 4

    def step(carry, x_t):
        h, c = carry
        gates = x_t @ w_ih.T + h @ w_hh.T + b_ih + b_hh
        i = jax.nn.sigmoid(gates[:, 0 * H:1 * H])
        f = jax.nn.sigmoid(gates[:, 1 * H:2 * H])
        g = jnp.tanh(gates[:, 2 * H:3 * H])
        o = jax.nn.sigmoid(gates[:, 3 * H:4 * H])
        c = f * c + i * g
        h = o * jnp.tanh(c)
        return (h, c), None

    (h, _), _ = lax.scan(step, (jnp.zeros((B, H)), jnp.zeros((B, H))),
                         jnp.transpose(x_btd, (1, 0, 2)))
    return h


def _forward_ref(params, x_text, x_audio, x_vision):
    lf = params["lf"]
    h_t = _lstm_ref(x_text, **lf[0])
    h_a = _lstm_ref(x_audio, **lf[1])
    h_v = _lstm_ref(x_vision, **lf[2])
    h_f = _lstm_ref(jnp.concatenate((x_text, x_audio, x_vision), -1), **params["ef"])
    feats = jnp.concatenate((h_t, h_a, h_v, h_f), axis=1)
    hd = params["head"]
    h = jnp.maximum(feats @ hd["w1"] + hd["b1"], 0.0)
    return h @ hd["w2"] + hd["b2"]


# ----------------------------------- main --------------------------------------------
if __name__ == "__main__":
    key = jax.random.PRNGKey(0)

    B, T = 2, 8
    input_sizes = [16, 8, 12]          # (text, audio, vision) feature dims
    hidden_size = 32                   # early-fusion LSTM hidden
    hidden_sizes = [16, 16, 16]        # late-fusion LSTM hiddens
    num_classes = 4

    kp, kt, ka, kv = jax.random.split(key, 4)
    params = init_model(kp, num_classes, input_sizes, hidden_size, hidden_sizes)

    x_text = jax.random.normal(kt, (B, T, input_sizes[0]), jnp.float32)
    x_audio = jax.random.normal(ka, (B, T, input_sizes[1]), jnp.float32)
    x_vision = jax.random.normal(kv, (B, T, input_sizes[2]), jnp.float32)

    ref = np.asarray(_forward_ref(params, x_text, x_audio, x_vision))

    # (a) f32-operand build: verifies the fused/packed kernel is numerically equivalent
    #     to the per-chain reference (packing adds only exact zeros).
    kparams_f32 = prepare_params(params, input_sizes, compute_dtype=jnp.float32)
    out_f32 = jax.jit(functools.partial(ef_lf_rnn_forward, kparams_f32))(
        x_text, x_audio, x_vision)
    jax.block_until_ready(out_f32)
    np.testing.assert_allclose(np.asarray(out_f32), ref, rtol=1e-4, atol=1e-4)

    # (b) bf16 MXU-operand build (perf-review default: bf16 matmul operands, f32
    #     accumulation and f32 gate/elementwise math) -> looser tolerance vs f32 reference.
    kparams = prepare_params(params, input_sizes)          # compute_dtype = bf16
    fwd = jax.jit(functools.partial(ef_lf_rnn_forward, kparams))
    logits = fwd(x_text, x_audio, x_vision)
    jax.block_until_ready(logits)
    np.testing.assert_allclose(np.asarray(logits), ref, rtol=5e-2, atol=5e-2)

    print("KERNEL_OK")
</pallas_src>

<mosaic_0001>
module attributes {stable_mosaic.version = 11 : i64} {
  func.func @kernel(%arg0: memref<64x36xf32, #tpu.memory_space<vmem>>, %arg1: memref<36x512xf32, #tpu.memory_space<vmem>>, %arg2: memref<128x512xf32, #tpu.memory_space<vmem>>, %arg3: memref<1x512xf32, #tpu.memory_space<vmem>>, %arg4: memref<128x40xf32, #tpu.memory_space<vmem>>, %arg5: memref<1x40xf32, #tpu.memory_space<vmem>>, %arg6: memref<40x4xf32, #tpu.memory_space<vmem>>, %arg7: memref<1x4xf32, #tpu.memory_space<vmem>>, %arg8: memref<2x4xf32, #tpu.memory_space<vmem>>) attributes {dimension_semantics = [], scalar_prefetch = 0 : i64, scratch_operands = 0 : i64, tpu.core_type = #tpu.core_type<tc>} {
    %c0 = arith.constant 0 : index
    %c0_0 = arith.constant 0 : index
    %0 = vector.load %arg0[%c0, %c0_0] : memref<64x36xf32, #tpu.memory_space<vmem>>, vector<64x36xf32>
    %c0_1 = arith.constant 0 : index
    %c0_2 = arith.constant 0 : index
    %1 = vector.load %arg1[%c0_1, %c0_2] : memref<36x512xf32, #tpu.memory_space<vmem>>, vector<36x512xf32>
    %cst = arith.constant dense<0.000000e+00> : vector<64x512xf32>
    %2 = tpu.matmul %0, %1, %cst {dimension_numbers = #tpu.dot_dimension_numbers<[1], [0], [0], [1], [0, 0, 1, 1], [], []>} : vector<64x36xf32>, vector<36x512xf32>, vector<64x512xf32> -> vector<64x512xf32>
    %c0_3 = arith.constant 0 : index
    %c0_4 = arith.constant 0 : index
    %3 = vector.load %arg3[%c0_3, %c0_4] : memref<1x512xf32, #tpu.memory_space<vmem>>, vector<1x512xf32>
    %4 = vector.broadcast %3 : vector<1x512xf32> to vector<64x512xf32>
    %5 = arith.addf %2, %4 : vector<64x512xf32>
    %c0_5 = arith.constant 0 : index
    %c0_6 = arith.constant 0 : index
    %6 = vector.load %arg2[%c0_5, %c0_6] : memref<128x512xf32, #tpu.memory_space<vmem>>, vector<128x512xf32>
    %cst_7 = arith.constant 0.000000e+00 : f32
    %7 = vector.broadcast %cst_7 : f32 to vector<8x128xf32>
    %cst_8 = arith.constant 0.000000e+00 : f32
    %8 = vector.broadcast %cst_8 : f32 to vector<8x128xf32>
    %9 = vector.extract_strided_slice %5 {offsets = [0, 0], sizes = [8, 512], strides = [1, 1]} : vector<64x512xf32> to vector<8x512xf32>
    %cst_9 = arith.constant dense<0.000000e+00> : vector<8x512xf32>
    %10 = tpu.matmul %7, %6, %cst_9 {dimension_numbers = #tpu.dot_dimension_numbers<[1], [0], [0], [1], [0, 0, 1, 1], [], []>} : vector<8x128xf32>, vector<128x512xf32>, vector<8x512xf32> -> vector<8x512xf32>
    %11 = arith.addf %9, %10 : vector<8x512xf32>
    %12 = vector.extract_strided_slice %11 {offsets = [0, 0], sizes = [8, 128], strides = [1, 1]} : vector<8x512xf32> to vector<8x128xf32>
    %13 = arith.negf %12 : vector<8x128xf32>
    %14 = math.exp %13 : vector<8x128xf32>
    %cst_10 = arith.constant 1.000000e+00 : f32
    %15 = vector.broadcast %cst_10 : f32 to vector<8x128xf32>
    %16 = arith.addf %15, %14 : vector<8x128xf32>
    %17 = arith.divf %15, %16 : vector<8x128xf32>
    %18 = vector.extract_strided_slice %11 {offsets = [0, 128], sizes = [8, 128], strides = [1, 1]} : vector<8x512xf32> to vector<8x128xf32>
    %19 = arith.negf %18 : vector<8x128xf32>
    %20 = math.exp %19 : vector<8x128xf32>
    %cst_11 = arith.constant 1.000000e+00 : f32
    %21 = vector.broadcast %cst_11 : f32 to vector<8x128xf32>
    %22 = arith.addf %21, %20 : vector<8x128xf32>
    %23 = arith.divf %21, %22 : vector<8x128xf32>
    %24 = vector.extract_strided_slice %11 {offsets = [0, 256], sizes = [8, 128], strides = [1, 1]} : vector<8x512xf32> to vector<8x128xf32>
    %25 = math.tanh %24 : vector<8x128xf32>
    %26 = vector.extract_strided_slice %11 {offsets = [0, 384], sizes = [8, 128], strides = [1, 1]} : vector<8x512xf32> to vector<8x128xf32>
    %27 = arith.negf %26 : vector<8x128xf32>
    %28 = math.exp %27 : vector<8x128xf32>
    %cst_12 = arith.constant 1.000000e+00 : f32
    %29 = vector.broadcast %cst_12 : f32 to vector<8x128xf32>
    %30 = arith.addf %29, %28 : vector<8x128xf32>
    %31 = arith.divf %29, %30 : vector<8x128xf32>
    %32 = arith.mulf %23, %8 : vector<8x128xf32>
    %33 = arith.mulf %17, %25 : vector<8x128xf32>
    %34 = arith.addf %32, %33 : vector<8x128xf32>
    %35 = math.tanh %34 : vector<8x128xf32>
    %36 = arith.mulf %31, %35 : vector<8x128xf32>
    %37 = vector.extract_strided_slice %5 {offsets = [8, 0], sizes = [8, 512], strides = [1, 1]} : vector<64x512xf32> to vector<8x512xf32>
    %cst_13 = arith.constant dense<0.000000e+00> : vector<8x512xf32>
    %38 = tpu.matmul %36, %6, %cst_13 {dimension_numbers = #tpu.dot_dimension_numbers<[1], [0], [0], [1], [0, 0, 1, 1], [], []>} : vector<8x128xf32>, vector<128x512xf32>, vector<8x512xf32> -> vector<8x512xf32>
    %39 = arith.addf %37, %38 : vector<8x512xf32>
    %40 = vector.extract_strided_slice %39 {offsets = [0, 0], sizes = [8, 128], strides = [1, 1]} : vector<8x512xf32> to vector<8x128xf32>
    %41 = arith.negf %40 : vector<8x128xf32>
    %42 = math.exp %41 : vector<8x128xf32>
    %cst_14 = arith.constant 1.000000e+00 : f32
    %43 = vector.broadcast %cst_14 : f32 to vector<8x128xf32>
    %44 = arith.addf %43, %42 : vector<8x128xf32>
    %45 = arith.divf %43, %44 : vector<8x128xf32>
    %46 = vector.extract_strided_slice %39 {offsets = [0, 128], sizes = [8, 128], strides = [1, 1]} : vector<8x512xf32> to vector<8x128xf32>
    %47 = arith.negf %46 : vector<8x128xf32>
    %48 = math.exp %47 : vector<8x128xf32>
    %cst_15 = arith.constant 1.000000e+00 : f32
    %49 = vector.broadcast %cst_15 : f32 to vector<8x128xf32>
    %50 = arith.addf %49, %48 : vector<8x128xf32>
    %51 = arith.divf %49, %50 : vector<8x128xf32>
    %52 = vector.extract_strided_slice %39 {offsets = [0, 256], sizes = [8, 128], strides = [1, 1]} : vector<8x512xf32> to vector<8x128xf32>
    %53 = math.tanh %52 : vector<8x128xf32>
    %54 = vector.extract_strided_slice %39 {offsets = [0, 384], sizes = [8, 128], strides = [1, 1]} : vector<8x512xf32> to vector<8x128xf32>
    %55 = arith.negf %54 : vector<8x128xf32>
    %56 = math.exp %55 : vector<8x128xf32>
    %cst_16 = arith.constant 1.000000e+00 : f32
    %57 = vector.broadcast %cst_16 : f32 to vector<8x128xf32>
    %58 = arith.addf %57, %56 : vector<8x128xf32>
    %59 = arith.divf %57, %58 : vector<8x128xf32>
    %60 = arith.mulf %51, %34 : vector<8x128xf32>
    %61 = arith.mulf %45, %53 : vector<8x128xf32>
    %62 = arith.addf %60, %61 : vector<8x128xf32>
    %63 = math.tanh %62 : vector<8x128xf32>
    %64 = arith.mulf %59, %63 : vector<8x128xf32>
    %65 = vector.extract_strided_slice %5 {offsets = [16, 0], sizes = [8, 512], strides = [1, 1]} : vector<64x512xf32> to vector<8x512xf32>
    %cst_17 = arith.constant dense<0.000000e+00> : vector<8x512xf32>
    %66 = tpu.matmul %64, %6, %cst_17 {dimension_numbers = #tpu.dot_dimension_numbers<[1], [0], [0], [1], [0, 0, 1, 1], [], []>} : vector<8x128xf32>, vector<128x512xf32>, vector<8x512xf32> -> vector<8x512xf32>
    %67 = arith.addf %65, %66 : vector<8x512xf32>
    %68 = vector.extract_strided_slice %67 {offsets = [0, 0], sizes = [8, 128], strides = [1, 1]} : vector<8x512xf32> to vector<8x128xf32>
    %69 = arith.negf %68 : vector<8x128xf32>
    %70 = math.exp %69 : vector<8x128xf32>
    %cst_18 = arith.constant 1.000000e+00 : f32
    %71 = vector.broadcast %cst_18 : f32 to vector<8x128xf32>
    %72 = arith.addf %71, %70 : vector<8x128xf32>
    %73 = arith.divf %71, %72 : vector<8x128xf32>
    %74 = vector.extract_strided_slice %67 {offsets = [0, 128], sizes = [8, 128], strides = [1, 1]} : vector<8x512xf32> to vector<8x128xf32>
    %75 = arith.negf %74 : vector<8x128xf32>
    %76 = math.exp %75 : vector<8x128xf32>
    %cst_19 = arith.constant 1.000000e+00 : f32
    %77 = vector.broadcast %cst_19 : f32 to vector<8x128xf32>
    %78 = arith.addf %77, %76 : vector<8x128xf32>
    %79 = arith.divf %77, %78 : vector<8x128xf32>
    %80 = vector.extract_strided_slice %67 {offsets = [0, 256], sizes = [8, 128], strides = [1, 1]} : vector<8x512xf32> to vector<8x128xf32>
    %81 = math.tanh %80 : vector<8x128xf32>
    %82 = vector.extract_strided_slice %67 {offsets = [0, 384], sizes = [8, 128], strides = [1, 1]} : vector<8x512xf32> to vector<8x128xf32>
    %83 = arith.negf %82 : vector<8x128xf32>
    %84 = math.exp %83 : vector<8x128xf32>
    %cst_20 = arith.constant 1.000000e+00 : f32
    %85 = vector.broadcast %cst_20 : f32 to vector<8x128xf32>
    %86 = arith.addf %85, %84 : vector<8x128xf32>
    %87 = arith.divf %85, %86 : vector<8x128xf32>
    %88 = arith.mulf %79, %62 : vector<8x128xf32>
    %89 = arith.mulf %73, %81 : vector<8x128xf32>
    %90 = arith.addf %88, %89 : vector<8x128xf32>
    %91 = math.tanh %90 : vector<8x128xf32>
    %92 = arith.mulf %87, %91 : vector<8x128xf32>
    %93 = vector.extract_strided_slice %5 {offsets = [24, 0], sizes = [8, 512], strides = [1, 1]} : vector<64x512xf32> to vector<8x512xf32>
    %cst_21 = arith.constant dense<0.000000e+00> : vector<8x512xf32>
    %94 = tpu.matmul %92, %6, %cst_21 {dimension_numbers = #tpu.dot_dimension_numbers<[1], [0], [0], [1], [0, 0, 1, 1], [], []>} : vector<8x128xf32>, vector<128x512xf32>, vector<8x512xf32> -> vector<8x512xf32>
    %95 = arith.addf %93, %94 : vector<8x512xf32>
    %96 = vector.extract_strided_slice %95 {offsets = [0, 0], sizes = [8, 128], strides = [1, 1]} : vector<8x512xf32> to vector<8x128xf32>
    %97 = arith.negf %96 : vector<8x128xf32>
    %98 = math.exp %97 : vector<8x128xf32>
    %cst_22 = arith.constant 1.000000e+00 : f32
    %99 = vector.broadcast %cst_22 : f32 to vector<8x128xf32>
    %100 = arith.addf %99, %98 : vector<8x128xf32>
    %101 = arith.divf %99, %100 : vector<8x128xf32>
    %102 = vector.extract_strided_slice %95 {offsets = [0, 128], sizes = [8, 128], strides = [1, 1]} : vector<8x512xf32> to vector<8x128xf32>
    %103 = arith.negf %102 : vector<8x128xf32>
    %104 = math.exp %103 : vector<8x128xf32>
    %cst_23 = arith.constant 1.000000e+00 : f32
    %105 = vector.broadcast %cst_23 : f32 to vector<8x128xf32>
    %106 = arith.addf %105, %104 : vector<8x128xf32>
    %107 = arith.divf %105, %106 : vector<8x128xf32>
    %108 = vector.extract_strided_slice %95 {offsets = [0, 256], sizes = [8, 128], strides = [1, 1]} : vector<8x512xf32> to vector<8x128xf32>
    %109 = math.tanh %108 : vector<8x128xf32>
    %110 = vector.extract_strided_slice %95 {offsets = [0, 384], sizes = [8, 128], strides = [1, 1]} : vector<8x512xf32> to vector<8x128xf32>
    %111 = arith.negf %110 : vector<8x128xf32>
    %112 = math.exp %111 : vector<8x128xf32>
    %cst_24 = arith.constant 1.000000e+00 : f32
    %113 = vector.broadcast %cst_24 : f32 to vector<8x128xf32>
    %114 = arith.addf %113, %112 : vector<8x128xf32>
    %115 = arith.divf %113, %114 : vector<8x128xf32>
    %116 = arith.mulf %107, %90 : vector<8x128xf32>
    %117 = arith.mulf %101, %109 : vector<8x128xf32>
    %118 = arith.addf %116, %117 : vector<8x128xf32>
    %119 = math.tanh %118 : vector<8x128xf32>
    %120 = arith.mulf %115, %119 : vector<8x128xf32>
    %121 = vector.extract_strided_slice %5 {offsets = [32, 0], sizes = [8, 512], strides = [1, 1]} : vector<64x512xf32> to vector<8x512xf32>
    %cst_25 = arith.constant dense<0.000000e+00> : vector<8x512xf32>
    %122 = tpu.matmul %120, %6, %cst_25 {dimension_numbers = #tpu.dot_dimension_numbers<[1], [0], [0], [1], [0, 0, 1, 1], [], []>} : vector<8x128xf32>, vector<128x512xf32>, vector<8x512xf32> -> vector<8x512xf32>
    %123 = arith.addf %121, %122 : vector<8x512xf32>
    %124 = vector.extract_strided_slice %123 {offsets = [0, 0], sizes = [8, 128], strides = [1, 1]} : vector<8x512xf32> to vector<8x128xf32>
    %125 = arith.negf %124 : vector<8x128xf32>
    %126 = math.exp %125 : vector<8x128xf32>
    %cst_26 = arith.constant 1.000000e+00 : f32
    %127 = vector.broadcast %cst_26 : f32 to vector<8x128xf32>
    %128 = arith.addf %127, %126 : vector<8x128xf32>
    %129 = arith.divf %127, %128 : vector<8x128xf32>
    %130 = vector.extract_strided_slice %123 {offsets = [0, 128], sizes = [8, 128], strides = [1, 1]} : vector<8x512xf32> to vector<8x128xf32>
    %131 = arith.negf %130 : vector<8x128xf32>
    %132 = math.exp %131 : vector<8x128xf32>
    %cst_27 = arith.constant 1.000000e+00 : f32
    %133 = vector.broadcast %cst_27 : f32 to vector<8x128xf32>
    %134 = arith.addf %133, %132 : vector<8x128xf32>
    %135 = arith.divf %133, %134 : vector<8x128xf32>
    %136 = vector.extract_strided_slice %123 {offsets = [0, 256], sizes = [8, 128], strides = [1, 1]} : vector<8x512xf32> to vector<8x128xf32>
    %137 = math.tanh %136 : vector<8x128xf32>
    %138 = vector.extract_strided_slice %123 {offsets = [0, 384], sizes = [8, 128], strides = [1, 1]} : vector<8x512xf32> to vector<8x128xf32>
    %139 = arith.negf %138 : vector<8x128xf32>
    %140 = math.exp %139 : vector<8x128xf32>
    %cst_28 = arith.constant 1.000000e+00 : f32
    %141 = vector.broadcast %cst_28 : f32 to vector<8x128xf32>
    %142 = arith.addf %141, %140 : vector<8x128xf32>
    %143 = arith.divf %141, %142 : vector<8x128xf32>
    %144 = arith.mulf %135, %118 : vector<8x128xf32>
    %145 = arith.mulf %129, %137 : vector<8x128xf32>
    %146 = arith.addf %144, %145 : vector<8x128xf32>
    %147 = math.tanh %146 : vector<8x128xf32>
    %148 = arith.mulf %143, %147 : vector<8x128xf32>
    %149 = vector.extract_strided_slice %5 {offsets = [40, 0], sizes = [8, 512], strides = [1, 1]} : vector<64x512xf32> to vector<8x512xf32>
    %cst_29 = arith.constant dense<0.000000e+00> : vector<8x512xf32>
    %150 = tpu.matmul %148, %6, %cst_29 {dimension_numbers = #tpu.dot_dimension_numbers<[1], [0], [0], [1], [0, 0, 1, 1], [], []>} : vector<8x128xf32>, vector<128x512xf32>, vector<8x512xf32> -> vector<8x512xf32>
    %151 = arith.addf %149, %150 : vector<8x512xf32>
    %152 = vector.extract_strided_slice %151 {offsets = [0, 0], sizes = [8, 128], strides = [1, 1]} : vector<8x512xf32> to vector<8x128xf32>
    %153 = arith.negf %152 : vector<8x128xf32>
    %154 = math.exp %153 : vector<8x128xf32>
    %cst_30 = arith.constant 1.000000e+00 : f32
    %155 = vector.broadcast %cst_30 : f32 to vector<8x128xf32>
    %156 = arith.addf %155, %154 : vector<8x128xf32>
    %157 = arith.divf %155, %156 : vector<8x128xf32>
    %158 = vector.extract_strided_slice %151 {offsets = [0, 128], sizes = [8, 128], strides = [1, 1]} : vector<8x512xf32> to vector<8x128xf32>
    %159 = arith.negf %158 : vector<8x128xf32>
    %160 = math.exp %159 : vector<8x128xf32>
    %cst_31 = arith.constant 1.000000e+00 : f32
    %161 = vector.broadcast %cst_31 : f32 to vector<8x128xf32>
    %162 = arith.addf %161, %160 : vector<8x128xf32>
    %163 = arith.divf %161, %162 : vector<8x128xf32>
    %164 = vector.extract_strided_slice %151 {offsets = [0, 256], sizes = [8, 128], strides = [1, 1]} : vector<8x512xf32> to vector<8x128xf32>
    %165 = math.tanh %164 : vector<8x128xf32>
    %166 = vector.extract_strided_slice %151 {offsets = [0, 384], sizes = [8, 128], strides = [1, 1]} : vector<8x512xf32> to vector<8x128xf32>
    %167 = arith.negf %166 : vector<8x128xf32>
    %168 = math.exp %167 : vector<8x128xf32>
    %cst_32 = arith.constant 1.000000e+00 : f32
    %169 = vector.broadcast %cst_32 : f32 to vector<8x128xf32>
    %170 = arith.addf %169, %168 : vector<8x128xf32>
    %171 = arith.divf %169, %170 : vector<8x128xf32>
    %172 = arith.mulf %163, %146 : vector<8x128xf32>
    %173 = arith.mulf %157, %165 : vector<8x128xf32>
    %174 = arith.addf %172, %173 : vector<8x128xf32>
    %175 = math.tanh %174 : vector<8x128xf32>
    %176 = arith.mulf %171, %175 : vector<8x128xf32>
    %177 = vector.extract_strided_slice %5 {offsets = [48, 0], sizes = [8, 512], strides = [1, 1]} : vector<64x512xf32> to vector<8x512xf32>
    %cst_33 = arith.constant dense<0.000000e+00> : vector<8x512xf32>
    %178 = tpu.matmul %176, %6, %cst_33 {dimension_numbers = #tpu.dot_dimension_numbers<[1], [0], [0], [1], [0, 0, 1, 1], [], []>} : vector<8x128xf32>, vector<128x512xf32>, vector<8x512xf32> -> vector<8x512xf32>
    %179 = arith.addf %177, %178 : vector<8x512xf32>
    %180 = vector.extract_strided_slice %179 {offsets = [0, 0], sizes = [8, 128], strides = [1, 1]} : vector<8x512xf32> to vector<8x128xf32>
    %181 = arith.negf %180 : vector<8x128xf32>
    %182 = math.exp %181 : vector<8x128xf32>
    %cst_34 = arith.constant 1.000000e+00 : f32
    %183 = vector.broadcast %cst_34 : f32 to vector<8x128xf32>
    %184 = arith.addf %183, %182 : vector<8x128xf32>
    %185 = arith.divf %183, %184 : vector<8x128xf32>
    %186 = vector.extract_strided_slice %179 {offsets = [0, 128], sizes = [8, 128], strides = [1, 1]} : vector<8x512xf32> to vector<8x128xf32>
    %187 = arith.negf %186 : vector<8x128xf32>
    %188 = math.exp %187 : vector<8x128xf32>
    %cst_35 = arith.constant 1.000000e+00 : f32
    %189 = vector.broadcast %cst_35 : f32 to vector<8x128xf32>
    %190 = arith.addf %189, %188 : vector<8x128xf32>
    %191 = arith.divf %189, %190 : vector<8x128xf32>
    %192 = vector.extract_strided_slice %179 {offsets = [0, 256], sizes = [8, 128], strides = [1, 1]} : vector<8x512xf32> to vector<8x128xf32>
    %193 = math.tanh %192 : vector<8x128xf32>
    %194 = vector.extract_strided_slice %179 {offsets = [0, 384], sizes = [8, 128], strides = [1, 1]} : vector<8x512xf32> to vector<8x128xf32>
    %195 = arith.negf %194 : vector<8x128xf32>
    %196 = math.exp %195 : vector<8x128xf32>
    %cst_36 = arith.constant 1.000000e+00 : f32
    %197 = vector.broadcast %cst_36 : f32 to vector<8x128xf32>
    %198 = arith.addf %197, %196 : vector<8x128xf32>
    %199 = arith.divf %197, %198 : vector<8x128xf32>
    %200 = arith.mulf %191, %174 : vector<8x128xf32>
    %201 = arith.mulf %185, %193 : vector<8x128xf32>
    %202 = arith.addf %200, %201 : vector<8x128xf32>
    %203 = math.tanh %202 : vector<8x128xf32>
    %204 = arith.mulf %199, %203 : vector<8x128xf32>
    %205 = vector.extract_strided_slice %5 {offsets = [56, 0], sizes = [8, 512], strides = [1, 1]} : vector<64x512xf32> to vector<8x512xf32>
    %cst_37 = arith.constant dense<0.000000e+00> : vector<8x512xf32>
    %206 = tpu.matmul %204, %6, %cst_37 {dimension_numbers = #tpu.dot_dimension_numbers<[1], [0], [0], [1], [0, 0, 1, 1], [], []>} : vector<8x128xf32>, vector<128x512xf32>, vector<8x512xf32> -> vector<8x512xf32>
    %207 = arith.addf %205, %206 : vector<8x512xf32>
    %208 = vector.extract_strided_slice %207 {offsets = [0, 0], sizes = [8, 128], strides = [1, 1]} : vector<8x512xf32> to vector<8x128xf32>
    %209 = arith.negf %208 : vector<8x128xf32>
    %210 = math.exp %209 : vector<8x128xf32>
    %cst_38 = arith.constant 1.000000e+00 : f32
    %211 = vector.broadcast %cst_38 : f32 to vector<8x128xf32>
    %212 = arith.addf %211, %210 : vector<8x128xf32>
    %213 = arith.divf %211, %212 : vector<8x128xf32>
    %214 = vector.extract_strided_slice %207 {offsets = [0, 128], sizes = [8, 128], strides = [1, 1]} : vector<8x512xf32> to vector<8x128xf32>
    %215 = arith.negf %214 : vector<8x128xf32>
    %216 = math.exp %215 : vector<8x128xf32>
    %cst_39 = arith.constant 1.000000e+00 : f32
    %217 = vector.broadcast %cst_39 : f32 to vector<8x128xf32>
    %218 = arith.addf %217, %216 : vector<8x128xf32>
    %219 = arith.divf %217, %218 : vector<8x128xf32>
    %220 = vector.extract_strided_slice %207 {offsets = [0, 256], sizes = [8, 128], strides = [1, 1]} : vector<8x512xf32> to vector<8x128xf32>
    %221 = math.tanh %220 : vector<8x128xf32>
    %222 = vector.extract_strided_slice %207 {offsets = [0, 384], sizes = [8, 128], strides = [1, 1]} : vector<8x512xf32> to vector<8x128xf32>
    %223 = arith.negf %222 : vector<8x128xf32>
    %224 = math.exp %223 : vector<8x128xf32>
    %cst_40 = arith.constant 1.000000e+00 : f32
    %225 = vector.broadcast %cst_40 : f32 to vector<8x128xf32>
    %226 = arith.addf %225, %224 : vector<8x128xf32>
    %227 = arith.divf %225, %226 : vector<8x128xf32>
    %228 = arith.mulf %219, %202 : vector<8x128xf32>
    %229 = arith.mulf %213, %221 : vector<8x128xf32>
    %230 = arith.addf %228, %229 : vector<8x128xf32>
    %231 = math.tanh %230 : vector<8x128xf32>
    %232 = arith.mulf %227, %231 : vector<8x128xf32>
    %c0_41 = arith.constant 0 : index
    %c0_42 = arith.constant 0 : index
    %233 = vector.load %arg4[%c0_41, %c0_42] : memref<128x40xf32, #tpu.memory_space<vmem>>, vector<128x40xf32>
    %cst_43 = arith.constant dense<0.000000e+00> : vector<8x40xf32>
    %234 = tpu.matmul %232, %233, %cst_43 {dimension_numbers = #tpu.dot_dimension_numbers<[1], [0], [0], [1], [0, 0, 1, 1], [], []>} : vector<8x128xf32>, vector<128x40xf32>, vector<8x40xf32> -> vector<8x40xf32>
    %c0_44 = arith.constant 0 : index
    %c0_45 = arith.constant 0 : index
    %235 = vector.load %arg5[%c0_44, %c0_45] : memref<1x40xf32, #tpu.memory_space<vmem>>, vector<1x40xf32>
    %236 = vector.broadcast %235 : vector<1x40xf32> to vector<8x40xf32>
    %237 = arith.addf %234, %236 : vector<8x40xf32>
    %cst_46 = arith.constant 0.000000e+00 : f32
    %238 = vector.broadcast %cst_46 : f32 to vector<8x40xf32>
    %239 = arith.maximumf %237, %238 : vector<8x40xf32>
    %c0_47 = arith.constant 0 : index
    %c0_48 = arith.constant 0 : index
    %240 = vector.load %arg6[%c0_47, %c0_48] : memref<40x4xf32, #tpu.memory_space<vmem>>, vector<40x4xf32>
    %cst_49 = arith.constant dense<0.000000e+00> : vector<8x4xf32>
    %241 = tpu.matmul %239, %240, %cst_49 {dimension_numbers = #tpu.dot_dimension_numbers<[1], [0], [0], [1], [0, 0, 1, 1], [], []>} : vector<8x40xf32>, vector<40x4xf32>, vector<8x4xf32> -> vector<8x4xf32>
    %c0_50 = arith.constant 0 : index
    %c0_51 = arith.constant 0 : index
    %242 = vector.load %arg7[%c0_50, %c0_51] : memref<1x4xf32, #tpu.memory_space<vmem>>, vector<1x4xf32>
    %243 = vector.broadcast %242 : vector<1x4xf32> to vector<8x4xf32>
    %244 = arith.addf %241, %243 : vector<8x4xf32>
    %245 = vector.extract_strided_slice %244 {offsets = [0, 0], sizes = [2, 4], strides = [1, 1]} : vector<8x4xf32> to vector<2x4xf32>
    %c0_52 = arith.constant 0 : index
    %c0_53 = arith.constant 0 : index
    %246 = vector.load %arg8[%c0_52, %c0_53] : memref<2x4xf32, #tpu.memory_space<vmem>>, vector<2x4xf32>
    tpu.vector_store %arg8[%c0_52, %c0_53], %245 {strides = array<i32>} : memref<2x4xf32, #tpu.memory_space<vmem>>, vector<2x4xf32>,
    return
  }
}

</mosaic_0001>

<llo_original>
// kernel: ef_lf_rnn_forward.1
$region0: #{ef_lf_rnn_forward.1}
  #allocation0 [shape = 'u32[]', space=smem, size = 0x4, offset = 0x4, fixed_abs, tag = 'smem constant byte address 0x4 - core index']
  #allocation1 [shape = 'u32[144,128]{1,0:T(1,128)}', space=vmem, size = 0x12000, scoped, tag = 'internal scratch']
  %s0 = inlined_call_operand.vmem [shape: f32[64,36], index: 0, kind: input, shape index: {}]
  %s1 = inlined_call_operand.vmem [shape: f32[36,512], index: 1, kind: input, shape index: {}]
  %s2 = inlined_call_operand.hbm [shape: f32[128,512], index: 2, kind: input, shape index: {}]
  %s3 = inlined_call_operand.hbm [shape: f32[1,512], index: 3, kind: input, shape index: {}]
  %s4 = inlined_call_operand.hbm [shape: f32[128,40], index: 4, kind: input, shape index: {}]
  %s5 = inlined_call_operand.vmem [shape: f32[1,40], index: 5, kind: input, shape index: {}]
  %s6 = inlined_call_operand.vmem [shape: f32[40,4], index: 6, kind: input, shape index: {}]
  %s7 = inlined_call_operand.vmem [shape: f32[1,4], index: 7, kind: input, shape index: {}]
  %s8 = inlined_call_operand.hbm [shape: f32[2,4], index: 8, kind: output, shape index: {}]
  %s9 = sld [smem:[#allocation0]]
  $region54: #{ef_lf_rnn_forward.1} parent=0
    _
  %s11 = ssub.s32 1, %s9
  %s12 = scalar_select 0, %s11, %s9
  $region1: #{ef_lf_rnn_forward.1} parent=0
    #allocation2 [shape = 'u8[262144]{0}', space=vmem, size = 0x40000, scoped, tag = 'input window, operand 2, single buffered']
    #allocation3 [shape = 's32[1]{0}', space=sflag, size = 0x4, scoped, tag = 'scoped memory for ef_lf_rnn_forward.1']
    #allocation4 [shape = 's32[1]{0}', space=sflag, size = 0x4, scoped, tag = 'scoped memory for ef_lf_rnn_forward.1']
    #allocation5 [shape = 'u8[2048]{0}', space=vmem, size = 0x800, scoped, tag = 'input window, operand 3, single buffered']
    #allocation6 [shape = 's32[1]{0}', space=sflag, size = 0x4, scoped, tag = 'scoped memory for ef_lf_rnn_forward.1']
    #allocation7 [shape = 'u8[65536]{0}', space=vmem, size = 0x10000, scoped, tag = 'input window, operand 4, single buffered']
    #allocation8 [shape = 'u8[1024]{0}', space=vmem, size = 0x400, scoped, tag = 'output window, operand 0, single buffered']
    %13 = vsyncpa [#allocation3], 0
    %14 = vsyncpa [#allocation6], 0
    %15 = vsyncpa [#allocation4], 0
    // Predicated region
    $region2: #{ef_lf_rnn_forward.1} parent=1 // pred_check
      _
    $region3: #{ef_lf_rnn_forward.1} parent=1 // pred_check_branch
      %17 = sbr.rel (0) target = $region5
    $region4: #{ef_lf_rnn_forward.1} parent=1 // pred_region
      _
    $region5: #{ef_lf_rnn_forward.1} parent=1 // pred_fallthru
      _
    // Predicated region
    $region6: #{ef_lf_rnn_forward.1} parent=1 // pred_check
      _
    $region7: #{ef_lf_rnn_forward.1} parent=1 // pred_check_branch
      %19 = sbr.rel (0) target = $region9
    $region8: #{ef_lf_rnn_forward.1} parent=1 // pred_region
      _
    $region9: #{ef_lf_rnn_forward.1} parent=1 // pred_fallthru
      _
    // Predicated region
    $region10: #{ef_lf_rnn_forward.1} parent=1 // pred_check
      _
    $region11: #{ef_lf_rnn_forward.1} parent=1 // pred_check_branch
      %21 = sbr.rel (0) target = $region13
    $region12: #{ef_lf_rnn_forward.1} parent=1 // pred_region
      %s23 = ssub.s32 8192, 8192
      %24 = vsyncadd [#allocation3], %s23
      %s25 = sshll.u32 [#allocation2], 4
      %s26 = int_to_ptr.vmem [resolvable:$true] %s25
      %31 = dma.hbm_to_vmem [thread:$0]  %s2, 8192, %s26, [#allocation3], 512, 512, 32
    $region13: #{ef_lf_rnn_forward.1} parent=1 // pred_fallthru
      _
    // Predicated region
    $region14: #{ef_lf_rnn_forward.1} parent=1 // pred_check
      _
    $region15: #{ef_lf_rnn_forward.1} parent=1 // pred_check_branch
      %33 = sbr.rel (0) target = $region17
    $region16: #{ef_lf_rnn_forward.1} parent=1 // pred_region
      %s35 = ssub.s32 64, 64
      %36 = vsyncadd [#allocation6], %s35
      %s38 = sshll.u32 [#allocation5], 4
      %s39 = int_to_ptr.vmem [resolvable:$true] %s38
      %41 = dma.hbm_to_vmem [thread:$0]  %s3, 64, %s39, [#allocation6]
    $region17: #{ef_lf_rnn_forward.1} parent=1 // pred_fallthru
      _
    // Predicated region
    $region18: #{ef_lf_rnn_forward.1} parent=1 // pred_check
      _
    $region19: #{ef_lf_rnn_forward.1} parent=1 // pred_check_branch
      %43 = sbr.rel (0) target = $region21
    $region20: #{ef_lf_rnn_forward.1} parent=1 // pred_region
      %s45 = ssub.s32 2048, 2048
      %46 = vsyncadd [#allocation6], %s45
      %s47 = sshll.u32 [#allocation7], 4
      %s48 = int_to_ptr.vmem [resolvable:$true] %s47
      %53 = dma.hbm_to_vmem [thread:$0]  %s4, 2048, %s48, [#allocation6], 128, 128, 8
    $region21: #{ef_lf_rnn_forward.1} parent=1 // pred_fallthru
      _
    // Predicated region
    $region22: #{ef_lf_rnn_forward.1} parent=1 // pred_check
      _
    $region23: #{ef_lf_rnn_forward.1} parent=1 // pred_check_branch
      %55 = sbr.rel (0) target = $region25
    $region24: #{ef_lf_rnn_forward.1} parent=1 // pred_region
      _
    $region25: #{ef_lf_rnn_forward.1} parent=1 // pred_fallthru
      _
    // Predicated region
    $region26: #{ef_lf_rnn_forward.1} parent=1 // pred_check
      _
    $region27: #{ef_lf_rnn_forward.1} parent=1 // pred_check_branch
      %57 = sbr.rel (0) target = $region29
    $region28: #{ef_lf_rnn_forward.1} parent=1 // pred_region
      _
    $region29: #{ef_lf_rnn_forward.1} parent=1 // pred_fallthru
      _
    // Predicated region
    $region30: #{ef_lf_rnn_forward.1} parent=1 // pred_check
      _
    $region31: #{ef_lf_rnn_forward.1} parent=1 // pred_check_branch
      %59 = sbr.rel (0) target = $region33
    $region32: #{ef_lf_rnn_forward.1} parent=1 // pred_region
      _
    $region33: #{ef_lf_rnn_forward.1} parent=1 // pred_fallthru
      _
    // Predicated region
    $region34: #{ef_lf_rnn_forward.1} parent=1 // pred_check
      _
    $region35: #{ef_lf_rnn_forward.1} parent=1 // pred_check_branch
      %61 = sbr.rel (0) target = $region37
    $region36: #{ef_lf_rnn_forward.1} parent=1 // pred_region
      %62 = dma.done [#allocation3], 8192
    $region37: #{ef_lf_rnn_forward.1} parent=1 // pred_fallthru
      _
    // Predicated region
    $region38: #{ef_lf_rnn_forward.1} parent=1 // pred_check
      _
    $region39: #{ef_lf_rnn_forward.1} parent=1 // pred_check_branch
      %64 = sbr.rel (0) target = $region41
    $region40: #{ef_lf_rnn_forward.1} parent=1 // pred_region
      %65 = dma.done [#allocation6], 64
    $region41: #{ef_lf_rnn_forward.1} parent=1 // pred_fallthru
      _
    // Predicated region
    $region42: #{ef_lf_rnn_forward.1} parent=1 // pred_check
      _
    $region43: #{ef_lf_rnn_forward.1} parent=1 // pred_check_branch
      %67 = sbr.rel (0) target = $region45
    $region44: #{ef_lf_rnn_forward.1} parent=1 // pred_region
      %68 = dma.done [#allocation6], 2048
    $region45: #{ef_lf_rnn_forward.1} parent=1 // pred_fallthru
      _
    %v69 = vld [vmem:[%s0] sm:$0xff]
    %v70 = vld [vmem:[%s0 + $0x8] sm:$0xff]
    %v71 = vld [vmem:[%s0 + $0x10] sm:$0xff]
    %v72 = vld [vmem:[%s0 + $0x18] sm:$0xff]
    %v73 = vld [vmem:[%s0 + $0x20] sm:$0xff]
    %v74 = vld [vmem:[%s0 + $0x28] sm:$0xff]
    %v75 = vld [vmem:[%s0 + $0x30] sm:$0xff]
    %v76 = vld [vmem:[%s0 + $0x38] sm:$0xff]
    %v77 = vld [vmem:[%s1] sm:$0xff]
    %v78 = vld [vmem:[%s1 + $0x8] sm:$0xff]
    %v79 = vld [vmem:[%s1 + $0x10] sm:$0xff]
    %v80 = vld [vmem:[%s1 + $0x18] sm:$0xff]
    %v81 = vld [vmem:[%s1 + $0x20] sm:$0xff]
    %v82 = vld [vmem:[%s1 + $0x28] sm:$0xff]
    %v83 = vld [vmem:[%s1 + $0x30] sm:$0xff]
    %v84 = vld [vmem:[%s1 + $0x38] sm:$0xff]
    %v85 = vld [vmem:[%s1 + $0x40] sm:$0xff]
    %v86 = vld [vmem:[%s1 + $0x48] sm:$0xff]
    %v87 = vld [vmem:[%s1 + $0x50] sm:$0xff]
    %v88 = vld [vmem:[%s1 + $0x58] sm:$0xff]
    %v89 = vld [vmem:[%s1 + $0x60] sm:$0xff]
    %v90 = vld [vmem:[%s1 + $0x68] sm:$0xff]
    %v91 = vld [vmem:[%s1 + $0x70] sm:$0xff]
    %v92 = vld [vmem:[%s1 + $0x78] sm:$0xff]
    %v93 = vld [vmem:[%s1 + $0x80] sm:$0xf]
    %v94 = vld [vmem:[%s1 + $0x88] sm:$0xf]
    %v95 = vld [vmem:[%s1 + $0x90] sm:$0xf]
    %v96 = vld [vmem:[%s1 + $0x98] sm:$0xf]
    %v97 = vld [vmem:[#allocation5] sm:$0xf]
    %v99 = vlaneseq
    %v100 = vshrl.u32 %v99, 7
    %v101 = vsub.s32 0, %v100
    %v102 = vrot.slane %v97, %v101
    %v103 = vlaneseq
    %v104 = vshrl.u32 %v103, 7
    %v105 = vsub.s32 1, %v104
    %v106 = vrot.slane %v97, %v105
    %v107 = vlaneseq
    %v108 = vshrl.u32 %v107, 7
    %v109 = vsub.s32 2, %v108
    %v110 = vrot.slane %v97, %v109
    %v111 = vlaneseq
    %v112 = vshrl.u32 %v111, 7
    %v113 = vsub.s32 3, %v112
    %v114 = vrot.slane %v97, %v113
    %vm119 = vcmask 293888
    %v121 = vsel %vm119, %v69, 0
    %v124 = vsel %vm119, %v70, 0
    %v127 = vsel %vm119, %v71, 0
    %v130 = vsel %vm119, %v72, 0
    %v133 = vsel %vm119, %v73, 0
    %v136 = vsel %vm119, %v74, 0
    %v139 = vsel %vm119, %v75, 0
    %v142 = vsel %vm119, %v76, 0
    %vm144 = vcmask 1043456
    %v146 = vsel %vm144, %v93, 0
    %v149 = vsel %vm144, %v94, 0
    %v152 = vsel %vm144, %v95, 0
    %v155 = vsel %vm144, %v96, 0
    %157 = vmatprep.subr.mxu0 %v78
    %158 = vmatpush1.msra.mxu0 %v77
    %159 = vmatprep.subr.mxu0 %v82
    %160 = vmatpush1.msra.mxu0 %v81
    %161 = vmatprep.subr.mxu0 %v86
    %162 = vmatpush1.msra.mxu0 %v85
    %163 = vmatprep.subr.mxu0 %v90
    %164 = vmatpush1.msra.mxu0 %v89
    %165 = vmatprep.subr.mxu0 %v149
    %166 = vmatpush1.msra.mxu0 %v146
    %167 = vmatprep.subr.mxu0 0.0
    %168 = vmatpush1.msra.mxu0 0.0
    %169 = vmatprep.subr.mxu0 0.0
    %170 = vmatpush1.msra.mxu0 0.0
    %171 = vmatprep.subr.mxu0 0.0
    %172 = vmatpush1.msra.mxu0 0.0
    %173 = vmatprep.subr.mxu0 0.0
    %174 = vmatpush1.msra.mxu0 0.0
    %175 = vmatprep.subr.mxu0 0.0
    %176 = vmatpush1.msra.mxu0 0.0
    %177 = vmatprep.subr.mxu0 0.0
    %178 = vmatpush1.msra.mxu0 0.0
    %179 = vmatprep.subr.mxu0 0.0
    %180 = vmatpush1.msra.mxu0 0.0
    %181 = vmatprep.subr.mxu0 0.0
    %182 = vmatpush1.msra.mxu0 0.0
    %183 = vmatprep.subr.mxu0 0.0
    %184 = vmatpush1.msra.mxu0 0.0
    %185 = vmatprep.subr.mxu0 0.0
    %186 = vmatpush1.msra.mxu0 0.0
    %187 = vmatprep.subr.mxu0 0.0
    %188 = vmatpush1.msra.mxu0 0.0
    %189 = vmatprep.subr.mxu0 0.0
    %190 = vmatpush1.msra.mxu0 0.0
    %191 = vmatprep.subr.mxu0 0.0
    %192 = vmatpush1.msra.mxu0 0.0
    %193 = vmatprep.subr.mxu0 0.0
    %194 = vmatpush1.msra.mxu0 0.0
    %195 = vmatprep.subr.mxu0 0.0
    %196 = vmatpush1.msra.mxu0 0.0
    %197 = vmatprep.subr.mxu0 0.0
    %198 = vmatpush1.msra.mxu0 0.0
    %199 = vmatprep.subr.mxu0 0.0
    %200 = vmatpush1.msra.mxu0 0.0
    %201 = vmatprep.subr.mxu0 0.0
    %202 = vmatpush1.msra.mxu0 0.0
    %203 = vmatprep.subr.mxu0 0.0
    %204 = vmatpush1.msra.mxu0 0.0
    %205 = vmatprep.subr.mxu0 0.0
    %206 = vmatpush1.msra.mxu0 0.0
    %207 = vmatprep.subr.mxu0 0.0
    %208 = vmatpush1.msra.mxu0 0.0
    %209 = vmatprep.subr.mxu0 0.0
    %210 = vmatpush1.msra.mxu0 0.0
    %211 = vmatprep.subr.mxu0 0.0
    %212 = vmatpush1.msra.mxu0 0.0
    %213 = vmatprep.subr.mxu0 0.0
    %214 = vmatpush1.msra.mxu0 0.0
    %215 = vmatprep.subr.mxu0 0.0
    %216 = vmatpush1.msra.mxu0 0.0
    %217 = vmatprep.subr.mxu0 0.0
    %218 = vmatpush1.msra.mxu0 0.0
    %219 = vmatprep.subr.mxu0 0.0
    %220 = vmatpush1.msra.mxu0 0.0
    %221 = vmatprep.mubr.f32.mxu0 0.0
    %222 = vmatmul.mubr.f32.gmra.mrb[0].mxu0 %v121
    %v223 = vpop.f32.mrb[0].mxu0
    %v224 = vadd.f32 %v102, %v223
    %v225 = vpop.f32.mrb[0].mxu0
    %v226 = vadd.f32 %v106, %v225
    %227 = vmatprep.mubr.f32.mxu0 0.0
    %228 = vmatmul.mubr.f32.gmra.mrb[0].mxu0 %v124
    %v229 = vpop.f32.mrb[0].mxu0
    %v230 = vadd.f32 %v102, %v229
    %v231 = vpop.f32.mrb[0].mxu0
    %v232 = vadd.f32 %v106, %v231
    %233 = vmatprep.mubr.f32.mxu0 0.0
    %234 = vmatmul.mubr.f32.gmra.mrb[0].mxu0 %v127
    %v235 = vpop.f32.mrb[0].mxu0
    %v236 = vadd.f32 %v102, %v235
    %v237 = vpop.f32.mrb[0].mxu0
    %v238 = vadd.f32 %v106, %v237
    %239 = vmatprep.mubr.f32.mxu0 0.0
    %240 = vmatmul.mubr.f32.gmra.mrb[0].mxu0 %v130
    %v241 = vpop.f32.mrb[0].mxu0
    %v242 = vadd.f32 %v102, %v241
    %v243 = vpop.f32.mrb[0].mxu0
    %v244 = vadd.f32 %v106, %v243
    %245 = vmatprep.mubr.f32.mxu0 0.0
    %246 = vmatmul.mubr.f32.gmra.mrb[0].mxu0 %v133
    %v247 = vpop.f32.mrb[0].mxu0
    %v248 = vadd.f32 %v102, %v247
    %v249 = vpop.f32.mrb[0].mxu0
    %v250 = vadd.f32 %v106, %v249
    %251 = vmatprep.mubr.f32.mxu0 0.0
    %252 = vmatmul.mubr.f32.gmra.mrb[0].mxu0 %v136
    %v253 = vpop.f32.mrb[0].mxu0
    %v254 = vadd.f32 %v102, %v253
    %v255 = vpop.f32.mrb[0].mxu0
    %v256 = vadd.f32 %v106, %v255
    %257 = vmatprep.mubr.f32.mxu0 0.0
    %258 = vmatmul.mubr.f32.gmra.mrb[0].mxu0 %v139
    %v259 = vpop.f32.mrb[0].mxu0
    %v260 = vadd.f32 %v102, %v259
    %v261 = vpop.f32.mrb[0].mxu0
    %v262 = vadd.f32 %v106, %v261
    %263 = vmatprep.mubr.f32.mxu0 0.0
    %264 = vmatmul.mubr.f32.gmra.mrb[0].mxu0 %v142
    %v265 = vpop.f32.mrb[0].mxu0
    %v266 = vadd.f32 %v102, %v265
    %v267 = vpop.f32.mrb[0].mxu0
    %v268 = vadd.f32 %v106, %v267
    %269 = vdwg.mxu0
    %270 = vmatprep.subr.mxu0 %v80
    %271 = vmatpush1.msra.mxu0 %v79
    %272 = vmatprep.subr.mxu0 %v84
    %273 = vmatpush1.msra.mxu0 %v83
    %274 = vmatprep.subr.mxu0 %v88
    %275 = vmatpush1.msra.mxu0 %v87
    %276 = vmatprep.subr.mxu0 %v92
    %277 = vmatpush1.msra.mxu0 %v91
    %278 = vmatprep.subr.mxu0 %v155
    %279 = vmatpush1.msra.mxu0 %v152
    %280 = vmatprep.subr.mxu0 0.0
    %281 = vmatpush1.msra.mxu0 0.0
    %282 = vmatprep.subr.mxu0 0.0
    %283 = vmatpush1.msra.mxu0 0.0
    %284 = vmatprep.subr.mxu0 0.0
    %285 = vmatpush1.msra.mxu0 0.0
    %286 = vmatprep.subr.mxu0 0.0
    %287 = vmatpush1.msra.mxu0 0.0
    %288 = vmatprep.subr.mxu0 0.0
    %289 = vmatpush1.msra.mxu0 0.0
    %290 = vmatprep.subr.mxu0 0.0
    %291 = vmatpush1.msra.mxu0 0.0
    %292 = vmatprep.subr.mxu0 0.0
    %293 = vmatpush1.msra.mxu0 0.0
    %294 = vmatprep.subr.mxu0 0.0
    %295 = vmatpush1.msra.mxu0 0.0
    %296 = vmatprep.subr.mxu0 0.0
    %297 = vmatpush1.msra.mxu0 0.0
    %298 = vmatprep.subr.mxu0 0.0
    %299 = vmatpush1.msra.mxu0 0.0
    %300 = vmatprep.subr.mxu0 0.0
    %301 = vmatpush1.msra.mxu0 0.0
    %302 = vmatprep.subr.mxu0 0.0
    %303 = vmatpush1.msra.mxu0 0.0
    %304 = vmatprep.subr.mxu0 0.0
    %305 = vmatpush1.msra.mxu0 0.0
    %306 = vmatprep.subr.mxu0 0.0
    %307 = vmatpush1.msra.mxu0 0.0
    %308 = vmatprep.subr.mxu0 0.0
    %309 = vmatpush1.msra.mxu0 0.0
    %310 = vmatprep.subr.mxu0 0.0
    %311 = vmatpush1.msra.mxu0 0.0
    %312 = vmatprep.subr.mxu0 0.0
    %313 = vmatpush1.msra.mxu0 0.0
    %314 = vmatprep.subr.mxu0 0.0
    %315 = vmatpush1.msra.mxu0 0.0
    %316 = vmatprep.subr.mxu0 0.0
    %317 = vmatpush1.msra.mxu0 0.0
    %318 = vmatprep.subr.mxu0 0.0
    %319 = vmatpush1.msra.mxu0 0.0
    %320 = vmatprep.subr.mxu0 0.0
    %321 = vmatpush1.msra.mxu0 0.0
    %322 = vmatprep.subr.mxu0 0.0
    %323 = vmatpush1.msra.mxu0 0.0
    %324 = vmatprep.subr.mxu0 0.0
    %325 = vmatpush1.msra.mxu0 0.0
    %326 = vmatprep.subr.mxu0 0.0
    %327 = vmatpush1.msra.mxu0 0.0
    %328 = vmatprep.subr.mxu0 0.0
    %329 = vmatpush1.msra.mxu0 0.0
    %330 = vmatprep.subr.mxu0 0.0
    %331 = vmatpush1.msra.mxu0 0.0
    %332 = vmatprep.subr.mxu0 0.0
    %333 = vmatpush1.msra.mxu0 0.0
    %334 = vmatprep.mubr.f32.mxu0 0.0
    %335 = vmatmul.mubr.f32.gmra.mrb[0].mxu0 %v121
    %v336 = vpop.f32.mrb[0].mxu0
    %v337 = vadd.f32 %v110, %v336
    %v338 = vpop.f32.mrb[0].mxu0
    %v339 = vadd.f32 %v114, %v338
    %340 = vmatprep.mubr.f32.mxu0 0.0
    %341 = vmatmul.mubr.f32.gmra.mrb[0].mxu0 %v124
    %v342 = vpop.f32.mrb[0].mxu0
    %v343 = vadd.f32 %v110, %v342
    %v344 = vpop.f32.mrb[0].mxu0
    %v345 = vadd.f32 %v114, %v344
    %346 = vmatprep.mubr.f32.mxu0 0.0
    %347 = vmatmul.mubr.f32.gmra.mrb[0].mxu0 %v127
    %v348 = vpop.f32.mrb[0].mxu0
    %v349 = vadd.f32 %v110, %v348
    %v350 = vpop.f32.mrb[0].mxu0
    %v351 = vadd.f32 %v114, %v350
    %352 = vmatprep.mubr.f32.mxu0 0.0
    %353 = vmatmul.mubr.f32.gmra.mrb[0].mxu0 %v130
    %v354 = vpop.f32.mrb[0].mxu0
    %v355 = vadd.f32 %v110, %v354
    %v356 = vpop.f32.mrb[0].mxu0
    %v357 = vadd.f32 %v114, %v356
    %358 = vmatprep.mubr.f32.mxu0 0.0
    %359 = vmatmul.mubr.f32.gmra.mrb[0].mxu0 %v133
    %v360 = vpop.f32.mrb[0].mxu0
    %v361 = vadd.f32 %v110, %v360
    %v362 = vpop.f32.mrb[0].mxu0
    %v363 = vadd.f32 %v114, %v362
    %364 = vmatprep.mubr.f32.mxu0 0.0
    %365 = vmatmul.mubr.f32.gmra.mrb[0].mxu0 %v136
    %v366 = vpop.f32.mrb[0].mxu0
    %v367 = vadd.f32 %v110, %v366
    %v368 = vpop.f32.mrb[0].mxu0
    %v369 = vadd.f32 %v114, %v368
    %370 = vmatprep.mubr.f32.mxu0 0.0
    %371 = vmatmul.mubr.f32.gmra.mrb[0].mxu0 %v139
    %v372 = vpop.f32.mrb[0].mxu0
    %v373 = vadd.f32 %v110, %v372
    %v374 = vpop.f32.mrb[0].mxu0
    %v375 = vadd.f32 %v114, %v374
    %376 = vmatprep.mubr.f32.mxu0 0.0
    %377 = vmatmul.mubr.f32.gmra.mrb[0].mxu0 %v142
    %v378 = vpop.f32.mrb[0].mxu0
    %v379 = vadd.f32 %v110, %v378
    %v380 = vpop.f32.mrb[0].mxu0
    %v381 = vadd.f32 %v114, %v380
    %382 = vdwg.mxu0
    %v383 = vld [vmem:[#allocation2] sm:$0xff]
    %v384 = vld [vmem:[#allocation2 + $0x8] sm:$0xff]
    %v385 = vld [vmem:[#allocation2 + $0x10] sm:$0xff]
    %v386 = vld [vmem:[#allocation2 + $0x18] sm:$0xff]
    %v387 = vld [vmem:[#allocation2 + $0x20] sm:$0xff]
    %v388 = vld [vmem:[#allocation2 + $0x28] sm:$0xff]
    %v389 = vld [vmem:[#allocation2 + $0x30] sm:$0xff]
    %v390 = vld [vmem:[#allocation2 + $0x38] sm:$0xff]
    %v391 = vld [vmem:[#allocation2 + $0x40] sm:$0xff]
    %v392 = vld [vmem:[#allocation2 + $0x48] sm:$0xff]
    %v393 = vld [vmem:[#allocation2 + $0x50] sm:$0xff]
    %v394 = vld [vmem:[#allocation2 + $0x58] sm:$0xff]
    %v395 = vld [vmem:[#allocation2 + $0x60] sm:$0xff]
    %v396 = vld [vmem:[#allocation2 + $0x68] sm:$0xff]
    %v397 = vld [vmem:[#allocation2 + $0x70] sm:$0xff]
    %v398 = vld [vmem:[#allocation2 + $0x78] sm:$0xff]
    %v399 = vld [vmem:[#allocation2 + $0x80] sm:$0xff]
    %v400 = vld [vmem:[#allocation2 + $0x88] sm:$0xff]
    %v401 = vld [vmem:[#allocation2 + $0x90] sm:$0xff]
    %v402 = vld [vmem:[#allocation2 + $0x98] sm:$0xff]
    %v403 = vld [vmem:[#allocation2 + $0xa0] sm:$0xff]
    %v404 = vld [vmem:[#allocation2 + $0xa8] sm:$0xff]
    %v405 = vld [vmem:[#allocation2 + $0xb0] sm:$0xff]
    %v406 = vld [vmem:[#allocation2 + $0xb8] sm:$0xff]
    %v407 = vld [vmem:[#allocation2 + $0xc0] sm:$0xff]
    %v408 = vld [vmem:[#allocation2 + $0xc8] sm:$0xff]
    %v409 = vld [vmem:[#allocation2 + $0xd0] sm:$0xff]
    %v410 = vld [vmem:[#allocation2 + $0xd8] sm:$0xff]
    %v411 = vld [vmem:[#allocation2 + $0xe0] sm:$0xff]
    %v412 = vld [vmem:[#allocation2 + $0xe8] sm:$0xff]
    %v413 = vld [vmem:[#allocation2 + $0xf0] sm:$0xff]
    %v414 = vld [vmem:[#allocation2 + $0xf8] sm:$0xff]
    %v415 = vld [vmem:[#allocation2 + $0x100] sm:$0xff]
    %v416 = vld [vmem:[#allocation2 + $0x108] sm:$0xff]
    %v417 = vld [vmem:[#allocation2 + $0x110] sm:$0xff]
    %v418 = vld [vmem:[#allocation2 + $0x118] sm:$0xff]
    %v419 = vld [vmem:[#allocation2 + $0x120] sm:$0xff]
    %v420 = vld [vmem:[#allocation2 + $0x128] sm:$0xff]
    %v421 = vld [vmem:[#allocation2 + $0x130] sm:$0xff]
    %v422 = vld [vmem:[#allocation2 + $0x138] sm:$0xff]
    %v423 = vld [vmem:[#allocation2 + $0x140] sm:$0xff]
    %v424 = vld [vmem:[#allocation2 + $0x148] sm:$0xff]
    %v425 = vld [vmem:[#allocation2 + $0x150] sm:$0xff]
    %v426 = vld [vmem:[#allocation2 + $0x158] sm:$0xff]
    %v427 = vld [vmem:[#allocation2 + $0x160] sm:$0xff]
    %v428 = vld [vmem:[#allocation2 + $0x168] sm:$0xff]
    %v429 = vld [vmem:[#allocation2 + $0x170] sm:$0xff]
    %v430 = vld [vmem:[#allocation2 + $0x178] sm:$0xff]
    %v431 = vld [vmem:[#allocation2 + $0x180] sm:$0xff]
    %v432 = vld [vmem:[#allocation2 + $0x188] sm:$0xff]
    %v433 = vld [vmem:[#allocation2 + $0x190] sm:$0xff]
    %v434 = vld [vmem:[#allocation2 + $0x198] sm:$0xff]
    %v435 = vld [vmem:[#allocation2 + $0x1a0] sm:$0xff]
    %v436 = vld [vmem:[#allocation2 + $0x1a8] sm:$0xff]
    %v437 = vld [vmem:[#allocation2 + $0x1b0] sm:$0xff]
    %v438 = vld [vmem:[#allocation2 + $0x1b8] sm:$0xff]
    %v439 = vld [vmem:[#allocation2 + $0x1c0] sm:$0xff]
    %v440 = vld [vmem:[#allocation2 + $0x1c8] sm:$0xff]
    %v441 = vld [vmem:[#allocation2 + $0x1d0] sm:$0xff]
    %v442 = vld [vmem:[#allocation2 + $0x1d8] sm:$0xff]
    %v443 = vld [vmem:[#allocation2 + $0x1e0] sm:$0xff]
    %v444 = vld [vmem:[#allocation2 + $0x1e8] sm:$0xff]
    %v445 = vld [vmem:[#allocation2 + $0x1f0] sm:$0xff]
    %v446 = vld [vmem:[#allocation2 + $0x1f8] sm:$0xff]
    %447 = vmatprep.subr.mxu0 %v384
    %448 = vmatpush1.msra.mxu0 %v383
    %449 = vmatprep.subr.mxu0 %v388
    %450 = vmatpush1.msra.mxu0 %v387
    %451 = vmatprep.subr.mxu0 %v392
    %452 = vmatpush1.msra.mxu0 %v391
    %453 = vmatprep.subr.mxu0 %v396
    %454 = vmatpush1.msra.mxu0 %v395
    %455 = vmatprep.subr.mxu0 %v400
    %456 = vmatpush1.msra.mxu0 %v399
    %457 = vmatprep.subr.mxu0 %v404
    %458 = vmatpush1.msra.mxu0 %v403
    %459 = vmatprep.subr.mxu0 %v408
    %460 = vmatpush1.msra.mxu0 %v407
    %461 = vmatprep.subr.mxu0 %v412
    %462 = vmatpush1.msra.mxu0 %v411
    %463 = vmatprep.subr.mxu0 %v416
    %464 = vmatpush1.msra.mxu0 %v415
    %465 = vmatprep.subr.mxu0 %v420
    %466 = vmatpush1.msra.mxu0 %v419
    %467 = vmatprep.subr.mxu0 %v424
    %468 = vmatpush1.msra.mxu0 %v423
    %469 = vmatprep.subr.mxu0 %v428
    %470 = vmatpush1.msra.mxu0 %v427
    %471 = vmatprep.subr.mxu0 %v432
    %472 = vmatpush1.msra.mxu0 %v431
    %473 = vmatprep.subr.mxu0 %v436
    %474 = vmatpush1.msra.mxu0 %v435
    %475 = vmatprep.subr.mxu0 %v440
    %476 = vmatpush1.msra.mxu0 %v439
    %477 = vmatprep.subr.mxu0 %v444
    %478 = vmatpush1.msra.mxu0 %v443
    %479 = vmatprep.subr.mxu0 0.0
    %480 = vmatpush1.msra.mxu0 0.0
    %481 = vmatprep.subr.mxu0 0.0
    %482 = vmatpush1.msra.mxu0 0.0
    %483 = vmatprep.subr.mxu0 0.0
    %484 = vmatpush1.msra.mxu0 0.0
    %485 = vmatprep.subr.mxu0 0.0
    %486 = vmatpush1.msra.mxu0 0.0
    %487 = vmatprep.subr.mxu0 0.0
    %488 = vmatpush1.msra.mxu0 0.0
    %489 = vmatprep.subr.mxu0 0.0
    %490 = vmatpush1.msra.mxu0 0.0
    %491 = vmatprep.subr.mxu0 0.0
    %492 = vmatpush1.msra.mxu0 0.0
    %493 = vmatprep.subr.mxu0 0.0
    %494 = vmatpush1.msra.mxu0 0.0
    %495 = vmatprep.subr.mxu0 0.0
    %496 = vmatpush1.msra.mxu0 0.0
    %497 = vmatprep.subr.mxu0 0.0
    %498 = vmatpush1.msra.mxu0 0.0
    %499 = vmatprep.subr.mxu0 0.0
    %500 = vmatpush1.msra.mxu0 0.0
    %501 = vmatprep.subr.mxu0 0.0
    %502 = vmatpush1.msra.mxu0 0.0
    %503 = vmatprep.subr.mxu0 0.0
    %504 = vmatpush1.msra.mxu0 0.0
    %505 = vmatprep.subr.mxu0 0.0
    %506 = vmatpush1.msra.mxu0 0.0
    %507 = vmatprep.subr.mxu0 0.0
    %508 = vmatpush1.msra.mxu0 0.0
    %509 = vmatprep.subr.mxu0 0.0
    %510 = vmatpush1.msra.mxu0 0.0
    %511 = vmatprep.mubr.f32.mxu0 0.0
    %512 = vmatmul.mubr.f32.gmra.mrb[0].mxu0 0.0
    %v513 = vpop.f32.mrb[0].mxu0
    %v514 = vadd.f32 0.0, %v513
    %v515 = vpop.f32.mrb[0].mxu0
    %v516 = vadd.f32 0.0, %v515
    %517 = vdwg.mxu0
    %518 = vmatprep.subr.mxu0 %v386
    %519 = vmatpush1.msra.mxu0 %v385
    %520 = vmatprep.subr.mxu0 %v390
    %521 = vmatpush1.msra.mxu0 %v389
    %522 = vmatprep.subr.mxu0 %v394
    %523 = vmatpush1.msra.mxu0 %v393
    %524 = vmatprep.subr.mxu0 %v398
    %525 = vmatpush1.msra.mxu0 %v397
    %526 = vmatprep.subr.mxu0 %v402
    %527 = vmatpush1.msra.mxu0 %v401
    %528 = vmatprep.subr.mxu0 %v406
    %529 = vmatpush1.msra.mxu0 %v405
    %530 = vmatprep.subr.mxu0 %v410
    %531 = vmatpush1.msra.mxu0 %v409
    %532 = vmatprep.subr.mxu0 %v414
    %533 = vmatpush1.msra.mxu0 %v413
    %534 = vmatprep.subr.mxu0 %v418
    %535 = vmatpush1.msra.mxu0 %v417
    %536 = vmatprep.subr.mxu0 %v422
    %537 = vmatpush1.msra.mxu0 %v421
    %538 = vmatprep.subr.mxu0 %v426
    %539 = vmatpush1.msra.mxu0 %v425
    %540 = vmatprep.subr.mxu0 %v430
    %541 = vmatpush1.msra.mxu0 %v429
    %542 = vmatprep.subr.mxu0 %v434
    %543 = vmatpush1.msra.mxu0 %v433
    %544 = vmatprep.subr.mxu0 %v438
    %545 = vmatpush1.msra.mxu0 %v437
    %546 = vmatprep.subr.mxu0 %v442
    %547 = vmatpush1.msra.mxu0 %v441
    %548 = vmatprep.subr.mxu0 %v446
    %549 = vmatpush1.msra.mxu0 %v445
    %550 = vmatprep.subr.mxu0 0.0
    %551 = vmatpush1.msra.mxu0 0.0
    %552 = vmatprep.subr.mxu0 0.0
    %553 = vmatpush1.msra.mxu0 0.0
    %554 = vmatprep.subr.mxu0 0.0
    %555 = vmatpush1.msra.mxu0 0.0
    %556 = vmatprep.subr.mxu0 0.0
    %557 = vmatpush1.msra.mxu0 0.0
    %558 = vmatprep.subr.mxu0 0.0
    %559 = vmatpush1.msra.mxu0 0.0
    %560 = vmatprep.subr.mxu0 0.0
    %561 = vmatpush1.msra.mxu0 0.0
    %562 = vmatprep.subr.mxu0 0.0
    %563 = vmatpush1.msra.mxu0 0.0
    %564 = vmatprep.subr.mxu0 0.0
    %565 = vmatpush1.msra.mxu0 0.0
    %566 = vmatprep.subr.mxu0 0.0
    %567 = vmatpush1.msra.mxu0 0.0
    %568 = vmatprep.subr.mxu0 0.0
    %569 = vmatpush1.msra.mxu0 0.0
    %570 = vmatprep.subr.mxu0 0.0
    %571 = vmatpush1.msra.mxu0 0.0
    %572 = vmatprep.subr.mxu0 0.0
    %573 = vmatpush1.msra.mxu0 0.0
    %574 = vmatprep.subr.mxu0 0.0
    %575 = vmatpush1.msra.mxu0 0.0
    %576 = vmatprep.subr.mxu0 0.0
    %577 = vmatpush1.msra.mxu0 0.0
    %578 = vmatprep.subr.mxu0 0.0
    %579 = vmatpush1.msra.mxu0 0.0
    %580 = vmatprep.subr.mxu0 0.0
    %581 = vmatpush1.msra.mxu0 0.0
    %582 = vmatprep.mubr.f32.mxu0 0.0
    %583 = vmatmul.mubr.f32.gmra.mrb[0].mxu0 0.0
    %v584 = vpop.f32.mrb[0].mxu0
    %v585 = vadd.f32 0.0, %v584
    %v586 = vpop.f32.mrb[0].mxu0
    %v587 = vadd.f32 0.0, %v586
    %588 = vdwg.mxu0
    %v589 = vadd.f32 %v224, %v514
    %v590 = vadd.f32 %v226, %v516
    %v591 = vadd.f32 %v337, %v585
    %v592 = vadd.f32 %v339, %v587
    %v593 = vxor.u32 %v589, 2147483648
    %v594 = vmul.f32 %v593, 1.442695
    %v595 = vpow.pop %v594
    %v596 = vadd.f32 %v595, 1.0
    %v597 = vrcp.pop %v596
    %v598 = vmul.f32 1.0, %v597
    %v599 = vxor.u32 %v590, 2147483648
    %v600 = vmul.f32 %v599, 1.442695
    %v601 = vpow.pop %v600
    %v602 = vadd.f32 %v601, 1.0
    %v603 = vrcp.pop %v602
    %v604 = vmul.f32 1.0, %v603
    %v605 = vtanh.pop %v591
    %v606 = vxor.u32 %v592, 2147483648
    %v607 = vmul.f32 %v606, 1.442695
    %v608 = vpow.pop %v607
    %v609 = vadd.f32 %v608, 1.0
    %v610 = vrcp.pop %v609
    %v611 = vmul.f32 1.0, %v610
    %v612 = vmul.f32 %v604, 0.0
    %v613 = vmul.f32 %v598, %v605
    %v614 = vadd.f32 %v612, %v613
    %v615 = vtanh.pop %v614
    %v616 = vmul.f32 %v611, %v615
    %617 = vmatprep.subr.mxu0 %v384
    %618 = vmatpush1.msra.mxu0 %v383
    %619 = vmatprep.subr.mxu0 %v388
    %620 = vmatpush1.msra.mxu0 %v387
    %621 = vmatprep.subr.mxu0 %v392
    %622 = vmatpush1.msra.mxu0 %v391
    %623 = vmatprep.subr.mxu0 %v396
    %624 = vmatpush1.msra.mxu0 %v395
    %625 = vmatprep.subr.mxu0 %v400
    %626 = vmatpush1.msra.mxu0 %v399
    %627 = vmatprep.subr.mxu0 %v404
    %628 = vmatpush1.msra.mxu0 %v403
    %629 = vmatprep.subr.mxu0 %v408
    %630 = vmatpush1.msra.mxu0 %v407
    %631 = vmatprep.subr.mxu0 %v412
    %632 = vmatpush1.msra.mxu0 %v411
    %633 = vmatprep.subr.mxu0 %v416
    %634 = vmatpush1.msra.mxu0 %v415
    %635 = vmatprep.subr.mxu0 %v420
    %636 = vmatpush1.msra.mxu0 %v419
    %637 = vmatprep.subr.mxu0 %v424
    %638 = vmatpush1.msra.mxu0 %v423
    %639 = vmatprep.subr.mxu0 %v428
    %640 = vmatpush1.msra.mxu0 %v427
    %641 = vmatprep.subr.mxu0 %v432
    %642 = vmatpush1.msra.mxu0 %v431
    %643 = vmatprep.subr.mxu0 %v436
    %644 = vmatpush1.msra.mxu0 %v435
    %645 = vmatprep.subr.mxu0 %v440
    %646 = vmatpush1.msra.mxu0 %v439
    %647 = vmatprep.subr.mxu0 %v444
    %648 = vmatpush1.msra.mxu0 %v443
    %649 = vmatprep.subr.mxu0 0.0
    %650 = vmatpush1.msra.mxu0 0.0
    %651 = vmatprep.subr.mxu0 0.0
    %652 = vmatpush1.msra.mxu0 0.0
    %653 = vmatprep.subr.mxu0 0.0
    %654 = vmatpush1.msra.mxu0 0.0
    %655 = vmatprep.subr.mxu0 0.0
    %656 = vmatpush1.msra.mxu0 0.0
    %657 = vmatprep.subr.mxu0 0.0
    %658 = vmatpush1.msra.mxu0 0.0
    %659 = vmatprep.subr.mxu0 0.0
    %660 = vmatpush1.msra.mxu0 0.0
    %661 = vmatprep.subr.mxu0 0.0
    %662 = vmatpush1.msra.mxu0 0.0
    %663 = vmatprep.subr.mxu0 0.0
    %664 = vmatpush1.msra.mxu0 0.0
    %665 = vmatprep.subr.mxu0 0.0
    %666 = vmatpush1.msra.mxu0 0.0
    %667 = vmatprep.subr.mxu0 0.0
    %668 = vmatpush1.msra.mxu0 0.0
    %669 = vmatprep.subr.mxu0 0.0
    %670 = vmatpush1.msra.mxu0 0.0
    %671 = vmatprep.subr.mxu0 0.0
    %672 = vmatpush1.msra.mxu0 0.0
    %673 = vmatprep.subr.mxu0 0.0
    %674 = vmatpush1.msra.mxu0 0.0
    %675 = vmatprep.subr.mxu0 0.0
    %676 = vmatpush1.msra.mxu0 0.0
    %677 = vmatprep.subr.mxu0 0.0
    %678 = vmatpush1.msra.mxu0 0.0
    %679 = vmatprep.subr.mxu0 0.0
    %680 = vmatpush1.msra.mxu0 0.0
    %681 = vmatprep.mubr.f32.mxu0 0.0
    %682 = vmatmul.mubr.f32.gmra.mrb[0].mxu0 %v616
    %v683 = vpop.f32.mrb[0].mxu0
    %v684 = vadd.f32 0.0, %v683
    %v685 = vpop.f32.mrb[0].mxu0
    %v686 = vadd.f32 0.0, %v685
    %687 = vdwg.mxu0
    %688 = vmatprep.subr.mxu0 %v386
    %689 = vmatpush1.msra.mxu0 %v385
    %690 = vmatprep.subr.mxu0 %v390
    %691 = vmatpush1.msra.mxu0 %v389
    %692 = vmatprep.subr.mxu0 %v394
    %693 = vmatpush1.msra.mxu0 %v393
    %694 = vmatprep.subr.mxu0 %v398
    %695 = vmatpush1.msra.mxu0 %v397
    %696 = vmatprep.subr.mxu0 %v402
    %697 = vmatpush1.msra.mxu0 %v401
    %698 = vmatprep.subr.mxu0 %v406
    %699 = vmatpush1.msra.mxu0 %v405
    %700 = vmatprep.subr.mxu0 %v410
    %701 = vmatpush1.msra.mxu0 %v409
    %702 = vmatprep.subr.mxu0 %v414
    %703 = vmatpush1.msra.mxu0 %v413
    %704 = vmatprep.subr.mxu0 %v418
    %705 = vmatpush1.msra.mxu0 %v417
    %706 = vmatprep.subr.mxu0 %v422
    %707 = vmatpush1.msra.mxu0 %v421
    %708 = vmatprep.subr.mxu0 %v426
    %709 = vmatpush1.msra.mxu0 %v425
    %710 = vmatprep.subr.mxu0 %v430
    %711 = vmatpush1.msra.mxu0 %v429
    %712 = vmatprep.subr.mxu0 %v434
    %713 = vmatpush1.msra.mxu0 %v433
    %714 = vmatprep.subr.mxu0 %v438
    %715 = vmatpush1.msra.mxu0 %v437
    %716 = vmatprep.subr.mxu0 %v442
    %717 = vmatpush1.msra.mxu0 %v441
    %718 = vmatprep.subr.mxu0 %v446
    %719 = vmatpush1.msra.mxu0 %v445
    %720 = vmatprep.subr.mxu0 0.0
    %721 = vmatpush1.msra.mxu0 0.0
    %722 = vmatprep.subr.mxu0 0.0
    %723 = vmatpush1.msra.mxu0 0.0
    %724 = vmatprep.subr.mxu0 0.0
    %725 = vmatpush1.msra.mxu0 0.0
    %726 = vmatprep.subr.mxu0 0.0
    %727 = vmatpush1.msra.mxu0 0.0
    %728 = vmatprep.subr.mxu0 0.0
    %729 = vmatpush1.msra.mxu0 0.0
    %730 = vmatprep.subr.mxu0 0.0
    %731 = vmatpush1.msra.mxu0 0.0
    %732 = vmatprep.subr.mxu0 0.0
    %733 = vmatpush1.msra.mxu0 0.0
    %734 = vmatprep.subr.mxu0 0.0
    %735 = vmatpush1.msra.mxu0 0.0
    %736 = vmatprep.subr.mxu0 0.0
    %737 = vmatpush1.msra.mxu0 0.0
    %738 = vmatprep.subr.mxu0 0.0
    %739 = vmatpush1.msra.mxu0 0.0
    %740 = vmatprep.subr.mxu0 0.0
    %741 = vmatpush1.msra.mxu0 0.0
    %742 = vmatprep.subr.mxu0 0.0
    %743 = vmatpush1.msra.mxu0 0.0
    %744 = vmatprep.subr.mxu0 0.0
    %745 = vmatpush1.msra.mxu0 0.0
    %746 = vmatprep.subr.mxu0 0.0
    %747 = vmatpush1.msra.mxu0 0.0
    %748 = vmatprep.subr.mxu0 0.0
    %749 = vmatpush1.msra.mxu0 0.0
    %750 = vmatprep.subr.mxu0 0.0
    %751 = vmatpush1.msra.mxu0 0.0
    %752 = vmatprep.mubr.f32.mxu0 0.0
    %753 = vmatmul.mubr.f32.gmra.mrb[0].mxu0 %v616
    %v754 = vpop.f32.mrb[0].mxu0
    %v755 = vadd.f32 0.0, %v754
    %v756 = vpop.f32.mrb[0].mxu0
    %v757 = vadd.f32 0.0, %v756
    %758 = vdwg.mxu0
    %v759 = vadd.f32 %v230, %v684
    %v760 = vadd.f32 %v232, %v686
    %v761 = vadd.f32 %v343, %v755
    %v762 = vadd.f32 %v345, %v757
    %v763 = vxor.u32 %v759, 2147483648
    %v764 = vmul.f32 %v763, 1.442695
    %v765 = vpow.pop %v764
    %v766 = vadd.f32 %v765, 1.0
    %v767 = vrcp.pop %v766
    %v768 = vmul.f32 1.0, %v767
    %v769 = vxor.u32 %v760, 2147483648
    %v770 = vmul.f32 %v769, 1.442695
    %v771 = vpow.pop %v770
    %v772 = vadd.f32 %v771, 1.0
    %v773 = vrcp.pop %v772
    %v774 = vmul.f32 1.0, %v773
    %v775 = vtanh.pop %v761
    %v776 = vxor.u32 %v762, 2147483648
    %v777 = vmul.f32 %v776, 1.442695
    %v778 = vpow.pop %v777
    %v779 = vadd.f32 %v778, 1.0
    %v780 = vrcp.pop %v779
    %v781 = vmul.f32 1.0, %v780
    %v782 = vmul.f32 %v774, %v614
    %v783 = vmul.f32 %v768, %v775
    %v784 = vadd.f32 %v782, %v783
    %v785 = vtanh.pop %v784
    %v786 = vmul.f32 %v781, %v785
    %787 = vmatprep.subr.mxu0 %v384
    %788 = vmatpush1.msra.mxu0 %v383
    %789 = vmatprep.subr.mxu0 %v388
    %790 = vmatpush1.msra.mxu0 %v387
    %791 = vmatprep.subr.mxu0 %v392
    %792 = vmatpush1.msra.mxu0 %v391
    %793 = vmatprep.subr.mxu0 %v396
    %794 = vmatpush1.msra.mxu0 %v395
    %795 = vmatprep.subr.mxu0 %v400
    %796 = vmatpush1.msra.mxu0 %v399
    %797 = vmatprep.subr.mxu0 %v404
    %798 = vmatpush1.msra.mxu0 %v403
    %799 = vmatprep.subr.mxu0 %v408
    %800 = vmatpush1.msra.mxu0 %v407
    %801 = vmatprep.subr.mxu0 %v412
    %802 = vmatpush1.msra.mxu0 %v411
    %803 = vmatprep.subr.mxu0 %v416
    %804 = vmatpush1.msra.mxu0 %v415
    %805 = vmatprep.subr.mxu0 %v420
    %806 = vmatpush1.msra.mxu0 %v419
    %807 = vmatprep.subr.mxu0 %v424
    %808 = vmatpush1.msra.mxu0 %v423
    %809 = vmatprep.subr.mxu0 %v428
    %810 = vmatpush1.msra.mxu0 %v427
    %811 = vmatprep.subr.mxu0 %v432
    %812 = vmatpush1.msra.mxu0 %v431
    %813 = vmatprep.subr.mxu0 %v436
    %814 = vmatpush1.msra.mxu0 %v435
    %815 = vmatprep.subr.mxu0 %v440
    %816 = vmatpush1.msra.mxu0 %v439
    %817 = vmatprep.subr.mxu0 %v444
    %818 = vmatpush1.msra.mxu0 %v443
    %819 = vmatprep.subr.mxu0 0.0
    %820 = vmatpush1.msra.mxu0 0.0
    %821 = vmatprep.subr.mxu0 0.0
    %822 = vmatpush1.msra.mxu0 0.0
    %823 = vmatprep.subr.mxu0 0.0
    %824 = vmatpush1.msra.mxu0 0.0
    %825 = vmatprep.subr.mxu0 0.0
    %826 = vmatpush1.msra.mxu0 0.0
    %827 = vmatprep.subr.mxu0 0.0
    %828 = vmatpush1.msra.mxu0 0.0
    %829 = vmatprep.subr.mxu0 0.0
    %830 = vmatpush1.msra.mxu0 0.0
    %831 = vmatprep.subr.mxu0 0.0
    %832 = vmatpush1.msra.mxu0 0.0
    %833 = vmatprep.subr.mxu0 0.0
    %834 = vmatpush1.msra.mxu0 0.0
    %835 = vmatprep.subr.mxu0 0.0
    %836 = vmatpush1.msra.mxu0 0.0
    %837 = vmatprep.subr.mxu0 0.0
    %838 = vmatpush1.msra.mxu0 0.0
    %839 = vmatprep.subr.mxu0 0.0
    %840 = vmatpush1.msra.mxu0 0.0
    %841 = vmatprep.subr.mxu0 0.0
    %842 = vmatpush1.msra.mxu0 0.0
    %843 = vmatprep.subr.mxu0 0.0
    %844 = vmatpush1.msra.mxu0 0.0
    %845 = vmatprep.subr.mxu0 0.0
    %846 = vmatpush1.msra.mxu0 0.0
    %847 = vmatprep.subr.mxu0 0.0
    %848 = vmatpush1.msra.mxu0 0.0
    %849 = vmatprep.subr.mxu0 0.0
    %850 = vmatpush1.msra.mxu0 0.0
    %851 = vmatprep.mubr.f32.mxu0 0.0
    %852 = vmatmul.mubr.f32.gmra.mrb[0].mxu0 %v786
    %v853 = vpop.f32.mrb[0].mxu0
    %v854 = vadd.f32 0.0, %v853
    %v855 = vpop.f32.mrb[0].mxu0
    %v856 = vadd.f32 0.0, %v855
    %857 = vdwg.mxu0
    %858 = vmatprep.subr.mxu0 %v386
    %859 = vmatpush1.msra.mxu0 %v385
    %860 = vmatprep.subr.mxu0 %v390
    %861 = vmatpush1.msra.mxu0 %v389
    %862 = vmatprep.subr.mxu0 %v394
    %863 = vmatpush1.msra.mxu0 %v393
    %864 = vmatprep.subr.mxu0 %v398
    %865 = vmatpush1.msra.mxu0 %v397
    %866 = vmatprep.subr.mxu0 %v402
    %867 = vmatpush1.msra.mxu0 %v401
    %868 = vmatprep.subr.mxu0 %v406
    %869 = vmatpush1.msra.mxu0 %v405
    %870 = vmatprep.subr.mxu0 %v410
    %871 = vmatpush1.msra.mxu0 %v409
    %872 = vmatprep.subr.mxu0 %v414
    %873 = vmatpush1.msra.mxu0 %v413
    %874 = vmatprep.subr.mxu0 %v418
    %875 = vmatpush1.msra.mxu0 %v417
    %876 = vmatprep.subr.mxu0 %v422
    %877 = vmatpush1.msra.mxu0 %v421
    %878 = vmatprep.subr.mxu0 %v426
    %879 = vmatpush1.msra.mxu0 %v425
    %880 = vmatprep.subr.mxu0 %v430
    %881 = vmatpush1.msra.mxu0 %v429
    %882 = vmatprep.subr.mxu0 %v434
    %883 = vmatpush1.msra.mxu0 %v433
    %884 = vmatprep.subr.mxu0 %v438
    %885 = vmatpush1.msra.mxu0 %v437
    %886 = vmatprep.subr.mxu0 %v442
    %887 = vmatpush1.msra.mxu0 %v441
    %888 = vmatprep.subr.mxu0 %v446
    %889 = vmatpush1.msra.mxu0 %v445
    %890 = vmatprep.subr.mxu0 0.0
    %891 = vmatpush1.msra.mxu0 0.0
    %892 = vmatprep.subr.mxu0 0.0
    %893 = vmatpush1.msra.mxu0 0.0
    %894 = vmatprep.subr.mxu0 0.0
    %895 = vmatpush1.msra.mxu0 0.0
    %896 = vmatprep.subr.mxu0 0.0
    %897 = vmatpush1.msra.mxu0 0.0
    %898 = vmatprep.subr.mxu0 0.0
    %899 = vmatpush1.msra.mxu0 0.0
    %900 = vmatprep.subr.mxu0 0.0
    %901 = vmatpush1.msra.mxu0 0.0
    %902 = vmatprep.subr.mxu0 0.0
    %903 = vmatpush1.msra.mxu0 0.0
    %904 = vmatprep.subr.mxu0 0.0
    %905 = vmatpush1.msra.mxu0 0.0
    %906 = vmatprep.subr.mxu0 0.0
    %907 = vmatpush1.msra.mxu0 0.0
    %908 = vmatprep.subr.mxu0 0.0
    %909 = vmatpush1.msra.mxu0 0.0
    %910 = vmatprep.subr.mxu0 0.0
    %911 = vmatpush1.msra.mxu0 0.0
    %912 = vmatprep.subr.mxu0 0.0
    %913 = vmatpush1.msra.mxu0 0.0
    %914 = vmatprep.subr.mxu0 0.0
    %915 = vmatpush1.msra.mxu0 0.0
    %916 = vmatprep.subr.mxu0 0.0
    %917 = vmatpush1.msra.mxu0 0.0
    %918 = vmatprep.subr.mxu0 0.0
    %919 = vmatpush1.msra.mxu0 0.0
    %920 = vmatprep.subr.mxu0 0.0
    %921 = vmatpush1.msra.mxu0 0.0
    %922 = vmatprep.mubr.f32.mxu0 0.0
    %923 = vmatmul.mubr.f32.gmra.mrb[0].mxu0 %v786
    %v924 = vpop.f32.mrb[0].mxu0
    %v925 = vadd.f32 0.0, %v924
    %v926 = vpop.f32.mrb[0].mxu0
    %v927 = vadd.f32 0.0, %v926
    %928 = vdwg.mxu0
    %v929 = vadd.f32 %v236, %v854
    %v930 = vadd.f32 %v238, %v856
    %v931 = vadd.f32 %v349, %v925
    %v932 = vadd.f32 %v351, %v927
    %v933 = vxor.u32 %v929, 2147483648
    %v934 = vmul.f32 %v933, 1.442695
    %v935 = vpow.pop %v934
    %v936 = vadd.f32 %v935, 1.0
    %v937 = vrcp.pop %v936
    %v938 = vmul.f32 1.0, %v937
    %v939 = vxor.u32 %v930, 2147483648
    %v940 = vmul.f32 %v939, 1.442695
    %v941 = vpow.pop %v940
    %v942 = vadd.f32 %v941, 1.0
    %v943 = vrcp.pop %v942
    %v944 = vmul.f32 1.0, %v943
    %v945 = vtanh.pop %v931
    %v946 = vxor.u32 %v932, 2147483648
    %v947 = vmul.f32 %v946, 1.442695
    %v948 = vpow.pop %v947
    %v949 = vadd.f32 %v948, 1.0
    %v950 = vrcp.pop %v949
    %v951 = vmul.f32 1.0, %v950
    %v952 = vmul.f32 %v944, %v784
    %v953 = vmul.f32 %v938, %v945
    %v954 = vadd.f32 %v952, %v953
    %v955 = vtanh.pop %v954
    %v956 = vmul.f32 %v951, %v955
    %957 = vmatprep.subr.mxu0 %v384
    %958 = vmatpush1.msra.mxu0 %v383
    %959 = vmatprep.subr.mxu0 %v388
    %960 = vmatpush1.msra.mxu0 %v387
    %961 = vmatprep.subr.mxu0 %v392
    %962 = vmatpush1.msra.mxu0 %v391
    %963 = vmatprep.subr.mxu0 %v396
    %964 = vmatpush1.msra.mxu0 %v395
    %965 = vmatprep.subr.mxu0 %v400
    %966 = vmatpush1.msra.mxu0 %v399
    %967 = vmatprep.subr.mxu0 %v404
    %968 = vmatpush1.msra.mxu0 %v403
    %969 = vmatprep.subr.mxu0 %v408
    %970 = vmatpush1.msra.mxu0 %v407
    %971 = vmatprep.subr.mxu0 %v412
    %972 = vmatpush1.msra.mxu0 %v411
    %973 = vmatprep.subr.mxu0 %v416
    %974 = vmatpush1.msra.mxu0 %v415
    %975 = vmatprep.subr.mxu0 %v420
    %976 = vmatpush1.msra.mxu0 %v419
    %977 = vmatprep.subr.mxu0 %v424
    %978 = vmatpush1.msra.mxu0 %v423
    %979 = vmatprep.subr.mxu0 %v428
    %980 = vmatpush1.msra.mxu0 %v427
    %981 = vmatprep.subr.mxu0 %v432
    %982 = vmatpush1.msra.mxu0 %v431
    %983 = vmatprep.subr.mxu0 %v436
    %984 = vmatpush1.msra.mxu0 %v435
    %985 = vmatprep.subr.mxu0 %v440
    %986 = vmatpush1.msra.mxu0 %v439
    %987 = vmatprep.subr.mxu0 %v444
    %988 = vmatpush1.msra.mxu0 %v443
    %989 = vmatprep.subr.mxu0 0.0
    %990 = vmatpush1.msra.mxu0 0.0
    %991 = vmatprep.subr.mxu0 0.0
    %992 = vmatpush1.msra.mxu0 0.0
    %993 = vmatprep.subr.mxu0 0.0
    %994 = vmatpush1.msra.mxu0 0.0
    %995 = vmatprep.subr.mxu0 0.0
    %996 = vmatpush1.msra.mxu0 0.0
    %997 = vmatprep.subr.mxu0 0.0
    %998 = vmatpush1.msra.mxu0 0.0
    %999 = vmatprep.subr.mxu0 0.0
    %1000 = vmatpush1.msra.mxu0 0.0
    %1001 = vmatprep.subr.mxu0 0.0
    %1002 = vmatpush1.msra.mxu0 0.0
    %1003 = vmatprep.subr.mxu0 0.0
    %1004 = vmatpush1.msra.mxu0 0.0
    %1005 = vmatprep.subr.mxu0 0.0
    %1006 = vmatpush1.msra.mxu0 0.0
    %1007 = vmatprep.subr.mxu0 0.0
    %1008 = vmatpush1.msra.mxu0 0.0
    %1009 = vmatprep.subr.mxu0 0.0
    %1010 = vmatpush1.msra.mxu0 0.0
    %1011 = vmatprep.subr.mxu0 0.0
    %1012 = vmatpush1.msra.mxu0 0.0
    %1013 = vmatprep.subr.mxu0 0.0
    %1014 = vmatpush1.msra.mxu0 0.0
    %1015 = vmatprep.subr.mxu0 0.0
    %1016 = vmatpush1.msra.mxu0 0.0
    %1017 = vmatprep.subr.mxu0 0.0
    %1018 = vmatpush1.msra.mxu0 0.0
    %1019 = vmatprep.subr.mxu0 0.0
    %1020 = vmatpush1.msra.mxu0 0.0
    %1021 = vmatprep.mubr.f32.mxu0 0.0
    %1022 = vmatmul.mubr.f32.gmra.mrb[0].mxu0 %v956
    %v1023 = vpop.f32.mrb[0].mxu0
    %v1024 = vadd.f32 0.0, %v1023
    %v1025 = vpop.f32.mrb[0].mxu0
    %v1026 = vadd.f32 0.0, %v1025
    %1027 = vdwg.mxu0
    %1028 = vmatprep.subr.mxu0 %v386
    %1029 = vmatpush1.msra.mxu0 %v385
    %1030 = vmatprep.subr.mxu0 %v390
    %1031 = vmatpush1.msra.mxu0 %v389
    %1032 = vmatprep.subr.mxu0 %v394
    %1033 = vmatpush1.msra.mxu0 %v393
    %1034 = vmatprep.subr.mxu0 %v398
    %1035 = vmatpush1.msra.mxu0 %v397
    %1036 = vmatprep.subr.mxu0 %v402
    %1037 = vmatpush1.msra.mxu0 %v401
    %1038 = vmatprep.subr.mxu0 %v406
    %1039 = vmatpush1.msra.mxu0 %v405
    %1040 = vmatprep.subr.mxu0 %v410
    %1041 = vmatpush1.msra.mxu0 %v409
    %1042 = vmatprep.subr.mxu0 %v414
    %1043 = vmatpush1.msra.mxu0 %v413
    %1044 = vmatprep.subr.mxu0 %v418
    %1045 = vmatpush1.msra.mxu0 %v417
    %1046 = vmatprep.subr.mxu0 %v422
    %1047 = vmatpush1.msra.mxu0 %v421
    %1048 = vmatprep.subr.mxu0 %v426
    %1049 = vmatpush1.msra.mxu0 %v425
    %1050 = vmatprep.subr.mxu0 %v430
    %1051 = vmatpush1.msra.mxu0 %v429
    %1052 = vmatprep.subr.mxu0 %v434
    %1053 = vmatpush1.msra.mxu0 %v433
    %1054 = vmatprep.subr.mxu0 %v438
    %1055 = vmatpush1.msra.mxu0 %v437
    %1056 = vmatprep.subr.mxu0 %v442
    %1057 = vmatpush1.msra.mxu0 %v441
    %1058 = vmatprep.subr.mxu0 %v446
    %1059 = vmatpush1.msra.mxu0 %v445
    %1060 = vmatprep.subr.mxu0 0.0
    %1061 = vmatpush1.msra.mxu0 0.0
    %1062 = vmatprep.subr.mxu0 0.0
    %1063 = vmatpush1.msra.mxu0 0.0
    %1064 = vmatprep.subr.mxu0 0.0
    %1065 = vmatpush1.msra.mxu0 0.0
    %1066 = vmatprep.subr.mxu0 0.0
    %1067 = vmatpush1.msra.mxu0 0.0
    %1068 = vmatprep.subr.mxu0 0.0
    %1069 = vmatpush1.msra.mxu0 0.0
    %1070 = vmatprep.subr.mxu0 0.0
    %1071 = vmatpush1.msra.mxu0 0.0
    %1072 = vmatprep.subr.mxu0 0.0
    %1073 = vmatpush1.msra.mxu0 0.0
    %1074 = vmatprep.subr.mxu0 0.0
    %1075 = vmatpush1.msra.mxu0 0.0
    %1076 = vmatprep.subr.mxu0 0.0
    %1077 = vmatpush1.msra.mxu0 0.0
    %1078 = vmatprep.subr.mxu0 0.0
    %1079 = vmatpush1.msra.mxu0 0.0
    %1080 = vmatprep.subr.mxu0 0.0
    %1081 = vmatpush1.msra.mxu0 0.0
    %1082 = vmatprep.subr.mxu0 0.0
    %1083 = vmatpush1.msra.mxu0 0.0
    %1084 = vmatprep.subr.mxu0 0.0
    %1085 = vmatpush1.msra.mxu0 0.0
    %1086 = vmatprep.subr.mxu0 0.0
    %1087 = vmatpush1.msra.mxu0 0.0
    %1088 = vmatprep.subr.mxu0 0.0
    %1089 = vmatpush1.msra.mxu0 0.0
    %1090 = vmatprep.subr.mxu0 0.0
    %1091 = vmatpush1.msra.mxu0 0.0
    %1092 = vmatprep.mubr.f32.mxu0 0.0
    %1093 = vmatmul.mubr.f32.gmra.mrb[0].mxu0 %v956
    %v1094 = vpop.f32.mrb[0].mxu0
    %v1095 = vadd.f32 0.0, %v1094
    %v1096 = vpop.f32.mrb[0].mxu0
    %v1097 = vadd.f32 0.0, %v1096
    %1098 = vdwg.mxu0
    %v1099 = vadd.f32 %v242, %v1024
    %v1100 = vadd.f32 %v244, %v1026
    %v1101 = vadd.f32 %v355, %v1095
    %v1102 = vadd.f32 %v357, %v1097
    %v1103 = vxor.u32 %v1099, 2147483648
    %v1104 = vmul.f32 %v1103, 1.442695
    %v1105 = vpow.pop %v1104
    %v1106 = vadd.f32 %v1105, 1.0
    %v1107 = vrcp.pop %v1106
    %v1108 = vmul.f32 1.0, %v1107
    %v1109 = vxor.u32 %v1100, 2147483648
    %v1110 = vmul.f32 %v1109, 1.442695
    %v1111 = vpow.pop %v1110
    %v1112 = vadd.f32 %v1111, 1.0
    %v1113 = vrcp.pop %v1112
    %v1114 = vmul.f32 1.0, %v1113
    %v1115 = vtanh.pop %v1101
    %v1116 = vxor.u32 %v1102, 2147483648
    %v1117 = vmul.f32 %v1116, 1.442695
    %v1118 = vpow.pop %v1117
    %v1119 = vadd.f32 %v1118, 1.0
    %v1120 = vrcp.pop %v1119
    %v1121 = vmul.f32 1.0, %v1120
    %v1122 = vmul.f32 %v1114, %v954
    %v1123 = vmul.f32 %v1108, %v1115
    %v1124 = vadd.f32 %v1122, %v1123
    %v1125 = vtanh.pop %v1124
    %v1126 = vmul.f32 %v1121, %v1125
    %1127 = vmatprep.subr.mxu0 %v384
    %1128 = vmatpush1.msra.mxu0 %v383
    %1129 = vmatprep.subr.mxu0 %v388
    %1130 = vmatpush1.msra.mxu0 %v387
    %1131 = vmatprep.subr.mxu0 %v392
    %1132 = vmatpush1.msra.mxu0 %v391
    %1133 = vmatprep.subr.mxu0 %v396
    %1134 = vmatpush1.msra.mxu0 %v395
    %1135 = vmatprep.subr.mxu0 %v400
    %1136 = vmatpush1.msra.mxu0 %v399
    %1137 = vmatprep.subr.mxu0 %v404
    %1138 = vmatpush1.msra.mxu0 %v403
    %1139 = vmatprep.subr.mxu0 %v408
    %1140 = vmatpush1.msra.mxu0 %v407
    %1141 = vmatprep.subr.mxu0 %v412
    %1142 = vmatpush1.msra.mxu0 %v411
    %1143 = vmatprep.subr.mxu0 %v416
    %1144 = vmatpush1.msra.mxu0 %v415
    %1145 = vmatprep.subr.mxu0 %v420
    %1146 = vmatpush1.msra.mxu0 %v419
    %1147 = vmatprep.subr.mxu0 %v424
    %1148 = vmatpush1.msra.mxu0 %v423
    %1149 = vmatprep.subr.mxu0 %v428
    %1150 = vmatpush1.msra.mxu0 %v427
    %1151 = vmatprep.subr.mxu0 %v432
    %1152 = vmatpush1.msra.mxu0 %v431
    %1153 = vmatprep.subr.mxu0 %v436
    %1154 = vmatpush1.msra.mxu0 %v435
    %1155 = vmatprep.subr.mxu0 %v440
    %1156 = vmatpush1.msra.mxu0 %v439
    %1157 = vmatprep.subr.mxu0 %v444
    %1158 = vmatpush1.msra.mxu0 %v443
    %1159 = vmatprep.subr.mxu0 0.0
    %1160 = vmatpush1.msra.mxu0 0.0
    %1161 = vmatprep.subr.mxu0 0.0
    %1162 = vmatpush1.msra.mxu0 0.0
    %1163 = vmatprep.subr.mxu0 0.0
    %1164 = vmatpush1.msra.mxu0 0.0
    %1165 = vmatprep.subr.mxu0 0.0
    %1166 = vmatpush1.msra.mxu0 0.0
    %1167 = vmatprep.subr.mxu0 0.0
    %1168 = vmatpush1.msra.mxu0 0.0
    %1169 = vmatprep.subr.mxu0 0.0
    %1170 = vmatpush1.msra.mxu0 0.0
    %1171 = vmatprep.subr.mxu0 0.0
    %1172 = vmatpush1.msra.mxu0 0.0
    %1173 = vmatprep.subr.mxu0 0.0
    %1174 = vmatpush1.msra.mxu0 0.0
    %1175 = vmatprep.subr.mxu0 0.0
    %1176 = vmatpush1.msra.mxu0 0.0
    %1177 = vmatprep.subr.mxu0 0.0
    %1178 = vmatpush1.msra.mxu0 0.0
    %1179 = vmatprep.subr.mxu0 0.0
    %1180 = vmatpush1.msra.mxu0 0.0
    %1181 = vmatprep.subr.mxu0 0.0
    %1182 = vmatpush1.msra.mxu0 0.0
    %1183 = vmatprep.subr.mxu0 0.0
    %1184 = vmatpush1.msra.mxu0 0.0
    %1185 = vmatprep.subr.mxu0 0.0
    %1186 = vmatpush1.msra.mxu0 0.0
    %1187 = vmatprep.subr.mxu0 0.0
    %1188 = vmatpush1.msra.mxu0 0.0
    %1189 = vmatprep.subr.mxu0 0.0
    %1190 = vmatpush1.msra.mxu0 0.0
    %1191 = vmatprep.mubr.f32.mxu0 0.0
    %1192 = vmatmul.mubr.f32.gmra.mrb[0].mxu0 %v1126
    %v1193 = vpop.f32.mrb[0].mxu0
    %v1194 = vadd.f32 0.0, %v1193
    %v1195 = vpop.f32.mrb[0].mxu0
    %v1196 = vadd.f32 0.0, %v1195
    %1197 = vdwg.mxu0
    %1198 = vmatprep.subr.mxu0 %v386
    %1199 = vmatpush1.msra.mxu0 %v385
    %1200 = vmatprep.subr.mxu0 %v390
    %1201 = vmatpush1.msra.mxu0 %v389
    %1202 = vmatprep.subr.mxu0 %v394
    %1203 = vmatpush1.msra.mxu0 %v393
    %1204 = vmatprep.subr.mxu0 %v398
    %1205 = vmatpush1.msra.mxu0 %v397
    %1206 = vmatprep.subr.mxu0 %v402
    %1207 = vmatpush1.msra.mxu0 %v401
    %1208 = vmatprep.subr.mxu0 %v406
    %1209 = vmatpush1.msra.mxu0 %v405
    %1210 = vmatprep.subr.mxu0 %v410
    %1211 = vmatpush1.msra.mxu0 %v409
    %1212 = vmatprep.subr.mxu0 %v414
    %1213 = vmatpush1.msra.mxu0 %v413
    %1214 = vmatprep.subr.mxu0 %v418
    %1215 = vmatpush1.msra.mxu0 %v417
    %1216 = vmatprep.subr.mxu0 %v422
    %1217 = vmatpush1.msra.mxu0 %v421
    %1218 = vmatprep.subr.mxu0 %v426
    %1219 = vmatpush1.msra.mxu0 %v425
    %1220 = vmatprep.subr.mxu0 %v430
    %1221 = vmatpush1.msra.mxu0 %v429
    %1222 = vmatprep.subr.mxu0 %v434
    %1223 = vmatpush1.msra.mxu0 %v433
    %1224 = vmatprep.subr.mxu0 %v438
    %1225 = vmatpush1.msra.mxu0 %v437
    %1226 = vmatprep.subr.mxu0 %v442
    %1227 = vmatpush1.msra.mxu0 %v441
    %1228 = vmatprep.subr.mxu0 %v446
    %1229 = vmatpush1.msra.mxu0 %v445
    %1230 = vmatprep.subr.mxu0 0.0
    %1231 = vmatpush1.msra.mxu0 0.0
    %1232 = vmatprep.subr.mxu0 0.0
    %1233 = vmatpush1.msra.mxu0 0.0
    %1234 = vmatprep.subr.mxu0 0.0
    %1235 = vmatpush1.msra.mxu0 0.0
    %1236 = vmatprep.subr.mxu0 0.0
    %1237 = vmatpush1.msra.mxu0 0.0
    %1238 = vmatprep.subr.mxu0 0.0
    %1239 = vmatpush1.msra.mxu0 0.0
    %1240 = vmatprep.subr.mxu0 0.0
    %1241 = vmatpush1.msra.mxu0 0.0
    %1242 = vmatprep.subr.mxu0 0.0
    %1243 = vmatpush1.msra.mxu0 0.0
    %1244 = vmatprep.subr.mxu0 0.0
    %1245 = vmatpush1.msra.mxu0 0.0
    %1246 = vmatprep.subr.mxu0 0.0
    %1247 = vmatpush1.msra.mxu0 0.0
    %1248 = vmatprep.subr.mxu0 0.0
    %1249 = vmatpush1.msra.mxu0 0.0
    %1250 = vmatprep.subr.mxu0 0.0
    %1251 = vmatpush1.msra.mxu0 0.0
    %1252 = vmatprep.subr.mxu0 0.0
    %1253 = vmatpush1.msra.mxu0 0.0
    %1254 = vmatprep.subr.mxu0 0.0
    %1255 = vmatpush1.msra.mxu0 0.0
    %1256 = vmatprep.subr.mxu0 0.0
    %1257 = vmatpush1.msra.mxu0 0.0
    %1258 = vmatprep.subr.mxu0 0.0
    %1259 = vmatpush1.msra.mxu0 0.0
    %1260 = vmatprep.subr.mxu0 0.0
    %1261 = vmatpush1.msra.mxu0 0.0
    %1262 = vmatprep.mubr.f32.mxu0 0.0
    %1263 = vmatmul.mubr.f32.gmra.mrb[0].mxu0 %v1126
    %v1264 = vpop.f32.mrb[0].mxu0
    %v1265 = vadd.f32 0.0, %v1264
    %v1266 = vpop.f32.mrb[0].mxu0
    %v1267 = vadd.f32 0.0, %v1266
    %1268 = vdwg.mxu0
    %v1269 = vadd.f32 %v248, %v1194
    %v1270 = vadd.f32 %v250, %v1196
    %v1271 = vadd.f32 %v361, %v1265
    %v1272 = vadd.f32 %v363, %v1267
    %v1273 = vxor.u32 %v1269, 2147483648
    %v1274 = vmul.f32 %v1273, 1.442695
    %v1275 = vpow.pop %v1274
    %v1276 = vadd.f32 %v1275, 1.0
    %v1277 = vrcp.pop %v1276
    %v1278 = vmul.f32 1.0, %v1277
    %v1279 = vxor.u32 %v1270, 2147483648
    %v1280 = vmul.f32 %v1279, 1.442695
    %v1281 = vpow.pop %v1280
    %v1282 = vadd.f32 %v1281, 1.0
    %v1283 = vrcp.pop %v1282
    %v1284 = vmul.f32 1.0, %v1283
    %v1285 = vtanh.pop %v1271
    %v1286 = vxor.u32 %v1272, 2147483648
    %v1287 = vmul.f32 %v1286, 1.442695
    %v1288 = vpow.pop %v1287
    %v1289 = vadd.f32 %v1288, 1.0
    %v1290 = vrcp.pop %v1289
    %v1291 = vmul.f32 1.0, %v1290
    %v1292 = vmul.f32 %v1284, %v1124
    %v1293 = vmul.f32 %v1278, %v1285
    %v1294 = vadd.f32 %v1292, %v1293
    %v1295 = vtanh.pop %v1294
    %v1296 = vmul.f32 %v1291, %v1295
    %1297 = vmatprep.subr.mxu0 %v384
    %1298 = vmatpush1.msra.mxu0 %v383
    %1299 = vmatprep.subr.mxu0 %v388
    %1300 = vmatpush1.msra.mxu0 %v387
    %1301 = vmatprep.subr.mxu0 %v392
    %1302 = vmatpush1.msra.mxu0 %v391
    %1303 = vmatprep.subr.mxu0 %v396
    %1304 = vmatpush1.msra.mxu0 %v395
    %1305 = vmatprep.subr.mxu0 %v400
    %1306 = vmatpush1.msra.mxu0 %v399
    %1307 = vmatprep.subr.mxu0 %v404
    %1308 = vmatpush1.msra.mxu0 %v403
    %1309 = vmatprep.subr.mxu0 %v408
    %1310 = vmatpush1.msra.mxu0 %v407
    %1311 = vmatprep.subr.mxu0 %v412
    %1312 = vmatpush1.msra.mxu0 %v411
    %1313 = vmatprep.subr.mxu0 %v416
    %1314 = vmatpush1.msra.mxu0 %v415
    %1315 = vmatprep.subr.mxu0 %v420
    %1316 = vmatpush1.msra.mxu0 %v419
    %1317 = vmatprep.subr.mxu0 %v424
    %1318 = vmatpush1.msra.mxu0 %v423
    %1319 = vmatprep.subr.mxu0 %v428
    %1320 = vmatpush1.msra.mxu0 %v427
    %1321 = vmatprep.subr.mxu0 %v432
    %1322 = vmatpush1.msra.mxu0 %v431
    %1323 = vmatprep.subr.mxu0 %v436
    %1324 = vmatpush1.msra.mxu0 %v435
    %1325 = vmatprep.subr.mxu0 %v440
    %1326 = vmatpush1.msra.mxu0 %v439
    %1327 = vmatprep.subr.mxu0 %v444
    %1328 = vmatpush1.msra.mxu0 %v443
    %1329 = vmatprep.subr.mxu0 0.0
    %1330 = vmatpush1.msra.mxu0 0.0
    %1331 = vmatprep.subr.mxu0 0.0
    %1332 = vmatpush1.msra.mxu0 0.0
    %1333 = vmatprep.subr.mxu0 0.0
    %1334 = vmatpush1.msra.mxu0 0.0
    %1335 = vmatprep.subr.mxu0 0.0
    %1336 = vmatpush1.msra.mxu0 0.0
    %1337 = vmatprep.subr.mxu0 0.0
    %1338 = vmatpush1.msra.mxu0 0.0
    %1339 = vmatprep.subr.mxu0 0.0
    %1340 = vmatpush1.msra.mxu0 0.0
    %1341 = vmatprep.subr.mxu0 0.0
    %1342 = vmatpush1.msra.mxu0 0.0
    %1343 = vmatprep.subr.mxu0 0.0
    %1344 = vmatpush1.msra.mxu0 0.0
    %1345 = vmatprep.subr.mxu0 0.0
    %1346 = vmatpush1.msra.mxu0 0.0
    %1347 = vmatprep.subr.mxu0 0.0
    %1348 = vmatpush1.msra.mxu0 0.0
    %1349 = vmatprep.subr.mxu0 0.0
    %1350 = vmatpush1.msra.mxu0 0.0
    %1351 = vmatprep.subr.mxu0 0.0
    %1352 = vmatpush1.msra.mxu0 0.0
    %1353 = vmatprep.subr.mxu0 0.0
    %1354 = vmatpush1.msra.mxu0 0.0
    %1355 = vmatprep.subr.mxu0 0.0
    %1356 = vmatpush1.msra.mxu0 0.0
    %1357 = vmatprep.subr.mxu0 0.0
    %1358 = vmatpush1.msra.mxu0 0.0
    %1359 = vmatprep.subr.mxu0 0.0
    %1360 = vmatpush1.msra.mxu0 0.0
    %1361 = vmatprep.mubr.f32.mxu0 0.0
    %1362 = vmatmul.mubr.f32.gmra.mrb[0].mxu0 %v1296
    %v1363 = vpop.f32.mrb[0].mxu0
    %v1364 = vadd.f32 0.0, %v1363
    %v1365 = vpop.f32.mrb[0].mxu0
    %v1366 = vadd.f32 0.0, %v1365
    %1367 = vdwg.mxu0
    %1368 = vmatprep.subr.mxu0 %v386
    %1369 = vmatpush1.msra.mxu0 %v385
    %1370 = vmatprep.subr.mxu0 %v390
    %1371 = vmatpush1.msra.mxu0 %v389
    %1372 = vmatprep.subr.mxu0 %v394
    %1373 = vmatpush1.msra.mxu0 %v393
    %1374 = vmatprep.subr.mxu0 %v398
    %1375 = vmatpush1.msra.mxu0 %v397
    %1376 = vmatprep.subr.mxu0 %v402
    %1377 = vmatpush1.msra.mxu0 %v401
    %1378 = vmatprep.subr.mxu0 %v406
    %1379 = vmatpush1.msra.mxu0 %v405
    %1380 = vmatprep.subr.mxu0 %v410
    %1381 = vmatpush1.msra.mxu0 %v409
    %1382 = vmatprep.subr.mxu0 %v414
    %1383 = vmatpush1.msra.mxu0 %v413
    %1384 = vmatprep.subr.mxu0 %v418
    %1385 = vmatpush1.msra.mxu0 %v417
    %1386 = vmatprep.subr.mxu0 %v422
    %1387 = vmatpush1.msra.mxu0 %v421
    %1388 = vmatprep.subr.mxu0 %v426
    %1389 = vmatpush1.msra.mxu0 %v425
    %1390 = vmatprep.subr.mxu0 %v430
    %1391 = vmatpush1.msra.mxu0 %v429
    %1392 = vmatprep.subr.mxu0 %v434
    %1393 = vmatpush1.msra.mxu0 %v433
    %1394 = vmatprep.subr.mxu0 %v438
    %1395 = vmatpush1.msra.mxu0 %v437
    %1396 = vmatprep.subr.mxu0 %v442
    %1397 = vmatpush1.msra.mxu0 %v441
    %1398 = vmatprep.subr.mxu0 %v446
    %1399 = vmatpush1.msra.mxu0 %v445
    %1400 = vmatprep.subr.mxu0 0.0
    %1401 = vmatpush1.msra.mxu0 0.0
    %1402 = vmatprep.subr.mxu0 0.0
    %1403 = vmatpush1.msra.mxu0 0.0
    %1404 = vmatprep.subr.mxu0 0.0
    %1405 = vmatpush1.msra.mxu0 0.0
    %1406 = vmatprep.subr.mxu0 0.0
    %1407 = vmatpush1.msra.mxu0 0.0
    %1408 = vmatprep.subr.mxu0 0.0
    %1409 = vmatpush1.msra.mxu0 0.0
    %1410 = vmatprep.subr.mxu0 0.0
    %1411 = vmatpush1.msra.mxu0 0.0
    %1412 = vmatprep.subr.mxu0 0.0
    %1413 = vmatpush1.msra.mxu0 0.0
    %1414 = vmatprep.subr.mxu0 0.0
    %1415 = vmatpush1.msra.mxu0 0.0
    %1416 = vmatprep.subr.mxu0 0.0
    %1417 = vmatpush1.msra.mxu0 0.0
    %1418 = vmatprep.subr.mxu0 0.0
    %1419 = vmatpush1.msra.mxu0 0.0
    %1420 = vmatprep.subr.mxu0 0.0
    %1421 = vmatpush1.msra.mxu0 0.0
    %1422 = vmatprep.subr.mxu0 0.0
    %1423 = vmatpush1.msra.mxu0 0.0
    %1424 = vmatprep.subr.mxu0 0.0
    %1425 = vmatpush1.msra.mxu0 0.0
    %1426 = vmatprep.subr.mxu0 0.0
    %1427 = vmatpush1.msra.mxu0 0.0
    %1428 = vmatprep.subr.mxu0 0.0
    %1429 = vmatpush1.msra.mxu0 0.0
    %1430 = vmatprep.subr.mxu0 0.0
    %1431 = vmatpush1.msra.mxu0 0.0
    %1432 = vmatprep.mubr.f32.mxu0 0.0
    %1433 = vmatmul.mubr.f32.gmra.mrb[0].mxu0 %v1296
    %v1434 = vpop.f32.mrb[0].mxu0
    %v1435 = vadd.f32 0.0, %v1434
    %v1436 = vpop.f32.mrb[0].mxu0
    %v1437 = vadd.f32 0.0, %v1436
    %1438 = vdwg.mxu0
    %v1439 = vadd.f32 %v254, %v1364
    %v1440 = vadd.f32 %v256, %v1366
    %v1441 = vadd.f32 %v367, %v1435
    %v1442 = vadd.f32 %v369, %v1437
    %v1443 = vxor.u32 %v1439, 2147483648
    %v1444 = vmul.f32 %v1443, 1.442695
    %v1445 = vpow.pop %v1444
    %v1446 = vadd.f32 %v1445, 1.0
    %v1447 = vrcp.pop %v1446
    %v1448 = vmul.f32 1.0, %v1447
    %v1449 = vxor.u32 %v1440, 2147483648
    %v1450 = vmul.f32 %v1449, 1.442695
    %v1451 = vpow.pop %v1450
    %v1452 = vadd.f32 %v1451, 1.0
    %v1453 = vrcp.pop %v1452
    %v1454 = vmul.f32 1.0, %v1453
    %v1455 = vtanh.pop %v1441
    %v1456 = vxor.u32 %v1442, 2147483648
    %v1457 = vmul.f32 %v1456, 1.442695
    %v1458 = vpow.pop %v1457
    %v1459 = vadd.f32 %v1458, 1.0
    %v1460 = vrcp.pop %v1459
    %v1461 = vmul.f32 1.0, %v1460
    %v1462 = vmul.f32 %v1454, %v1294
    %v1463 = vmul.f32 %v1448, %v1455
    %v1464 = vadd.f32 %v1462, %v1463
    %v1465 = vtanh.pop %v1464
    %v1466 = vmul.f32 %v1461, %v1465
    %1467 = vmatprep.subr.mxu0 %v384
    %1468 = vmatpush1.msra.mxu0 %v383
    %1469 = vmatprep.subr.mxu0 %v388
    %1470 = vmatpush1.msra.mxu0 %v387
    %1471 = vmatprep.subr.mxu0 %v392
    %1472 = vmatpush1.msra.mxu0 %v391
    %1473 = vmatprep.subr.mxu0 %v396
    %1474 = vmatpush1.msra.mxu0 %v395
    %1475 = vmatprep.subr.mxu0 %v400
    %1476 = vmatpush1.msra.mxu0 %v399
    %1477 = vmatprep.subr.mxu0 %v404
    %1478 = vmatpush1.msra.mxu0 %v403
    %1479 = vmatprep.subr.mxu0 %v408
    %1480 = vmatpush1.msra.mxu0 %v407
    %1481 = vmatprep.subr.mxu0 %v412
    %1482 = vmatpush1.msra.mxu0 %v411
    %1483 = vmatprep.subr.mxu0 %v416
    %1484 = vmatpush1.msra.mxu0 %v415
    %1485 = vmatprep.subr.mxu0 %v420
    %1486 = vmatpush1.msra.mxu0 %v419
    %1487 = vmatprep.subr.mxu0 %v424
    %1488 = vmatpush1.msra.mxu0 %v423
    %1489 = vmatprep.subr.mxu0 %v428
    %1490 = vmatpush1.msra.mxu0 %v427
    %1491 = vmatprep.subr.mxu0 %v432
    %1492 = vmatpush1.msra.mxu0 %v431
    %1493 = vmatprep.subr.mxu0 %v436
    %1494 = vmatpush1.msra.mxu0 %v435
    %1495 = vmatprep.subr.mxu0 %v440
    %1496 = vmatpush1.msra.mxu0 %v439
    %1497 = vmatprep.subr.mxu0 %v444
    %1498 = vmatpush1.msra.mxu0 %v443
    %1499 = vmatprep.subr.mxu0 0.0
    %1500 = vmatpush1.msra.mxu0 0.0
    %1501 = vmatprep.subr.mxu0 0.0
    %1502 = vmatpush1.msra.mxu0 0.0
    %1503 = vmatprep.subr.mxu0 0.0
    %1504 = vmatpush1.msra.mxu0 0.0
    %1505 = vmatprep.subr.mxu0 0.0
    %1506 = vmatpush1.msra.mxu0 0.0
    %1507 = vmatprep.subr.mxu0 0.0
    %1508 = vmatpush1.msra.mxu0 0.0
    %1509 = vmatprep.subr.mxu0 0.0
    %1510 = vmatpush1.msra.mxu0 0.0
    %1511 = vmatprep.subr.mxu0 0.0
    %1512 = vmatpush1.msra.mxu0 0.0
    %1513 = vmatprep.subr.mxu0 0.0
    %1514 = vmatpush1.msra.mxu0 0.0
    %1515 = vmatprep.subr.mxu0 0.0
    %1516 = vmatpush1.msra.mxu0 0.0
    %1517 = vmatprep.subr.mxu0 0.0
    %1518 = vmatpush1.msra.mxu0 0.0
    %1519 = vmatprep.subr.mxu0 0.0
    %1520 = vmatpush1.msra.mxu0 0.0
    %1521 = vmatprep.subr.mxu0 0.0
    %1522 = vmatpush1.msra.mxu0 0.0
    %1523 = vmatprep.subr.mxu0 0.0
    %1524 = vmatpush1.msra.mxu0 0.0
    %1525 = vmatprep.subr.mxu0 0.0
    %1526 = vmatpush1.msra.mxu0 0.0
    %1527 = vmatprep.subr.mxu0 0.0
    %1528 = vmatpush1.msra.mxu0 0.0
    %1529 = vmatprep.subr.mxu0 0.0
    %1530 = vmatpush1.msra.mxu0 0.0
    %1531 = vmatprep.mubr.f32.mxu0 0.0
    %1532 = vmatmul.mubr.f32.gmra.mrb[0].mxu0 %v1466
    %v1533 = vpop.f32.mrb[0].mxu0
    %v1534 = vadd.f32 0.0, %v1533
    %v1535 = vpop.f32.mrb[0].mxu0
    %v1536 = vadd.f32 0.0, %v1535
    %1537 = vdwg.mxu0
    %1538 = vmatprep.subr.mxu0 %v386
    %1539 = vmatpush1.msra.mxu0 %v385
    %1540 = vmatprep.subr.mxu0 %v390
    %1541 = vmatpush1.msra.mxu0 %v389
    %1542 = vmatprep.subr.mxu0 %v394
    %1543 = vmatpush1.msra.mxu0 %v393
    %1544 = vmatprep.subr.mxu0 %v398
    %1545 = vmatpush1.msra.mxu0 %v397
    %1546 = vmatprep.subr.mxu0 %v402
    %1547 = vmatpush1.msra.mxu0 %v401
    %1548 = vmatprep.subr.mxu0 %v406
    %1549 = vmatpush1.msra.mxu0 %v405
    %1550 = vmatprep.subr.mxu0 %v410
    %1551 = vmatpush1.msra.mxu0 %v409
    %1552 = vmatprep.subr.mxu0 %v414
    %1553 = vmatpush1.msra.mxu0 %v413
    %1554 = vmatprep.subr.mxu0 %v418
    %1555 = vmatpush1.msra.mxu0 %v417
    %1556 = vmatprep.subr.mxu0 %v422
    %1557 = vmatpush1.msra.mxu0 %v421
    %1558 = vmatprep.subr.mxu0 %v426
    %1559 = vmatpush1.msra.mxu0 %v425
    %1560 = vmatprep.subr.mxu0 %v430
    %1561 = vmatpush1.msra.mxu0 %v429
    %1562 = vmatprep.subr.mxu0 %v434
    %1563 = vmatpush1.msra.mxu0 %v433
    %1564 = vmatprep.subr.mxu0 %v438
    %1565 = vmatpush1.msra.mxu0 %v437
    %1566 = vmatprep.subr.mxu0 %v442
    %1567 = vmatpush1.msra.mxu0 %v441
    %1568 = vmatprep.subr.mxu0 %v446
    %1569 = vmatpush1.msra.mxu0 %v445
    %1570 = vmatprep.subr.mxu0 0.0
    %1571 = vmatpush1.msra.mxu0 0.0
    %1572 = vmatprep.subr.mxu0 0.0
    %1573 = vmatpush1.msra.mxu0 0.0
    %1574 = vmatprep.subr.mxu0 0.0
    %1575 = vmatpush1.msra.mxu0 0.0
    %1576 = vmatprep.subr.mxu0 0.0
    %1577 = vmatpush1.msra.mxu0 0.0
    %1578 = vmatprep.subr.mxu0 0.0
    %1579 = vmatpush1.msra.mxu0 0.0
    %1580 = vmatprep.subr.mxu0 0.0
    %1581 = vmatpush1.msra.mxu0 0.0
    %1582 = vmatprep.subr.mxu0 0.0
    %1583 = vmatpush1.msra.mxu0 0.0
    %1584 = vmatprep.subr.mxu0 0.0
    %1585 = vmatpush1.msra.mxu0 0.0
    %1586 = vmatprep.subr.mxu0 0.0
    %1587 = vmatpush1.msra.mxu0 0.0
    %1588 = vmatprep.subr.mxu0 0.0
    %1589 = vmatpush1.msra.mxu0 0.0
    %1590 = vmatprep.subr.mxu0 0.0
    %1591 = vmatpush1.msra.mxu0 0.0
    %1592 = vmatprep.subr.mxu0 0.0
    %1593 = vmatpush1.msra.mxu0 0.0
    %1594 = vmatprep.subr.mxu0 0.0
    %1595 = vmatpush1.msra.mxu0 0.0
    %1596 = vmatprep.subr.mxu0 0.0
    %1597 = vmatpush1.msra.mxu0 0.0
    %1598 = vmatprep.subr.mxu0 0.0
    %1599 = vmatpush1.msra.mxu0 0.0
    %1600 = vmatprep.subr.mxu0 0.0
    %1601 = vmatpush1.msra.mxu0 0.0
    %1602 = vmatprep.mubr.f32.mxu0 0.0
    %1603 = vmatmul.mubr.f32.gmra.mrb[0].mxu0 %v1466
    %v1604 = vpop.f32.mrb[0].mxu0
    %v1605 = vadd.f32 0.0, %v1604
    %v1606 = vpop.f32.mrb[0].mxu0
    %v1607 = vadd.f32 0.0, %v1606
    %1608 = vdwg.mxu0
    %v1609 = vadd.f32 %v260, %v1534
    %v1610 = vadd.f32 %v262, %v1536
    %v1611 = vadd.f32 %v373, %v1605
    %v1612 = vadd.f32 %v375, %v1607
    %v1613 = vxor.u32 %v1609, 2147483648
    %v1614 = vmul.f32 %v1613, 1.442695
    %v1615 = vpow.pop %v1614
    %v1616 = vadd.f32 %v1615, 1.0
    %v1617 = vrcp.pop %v1616
    %v1618 = vmul.f32 1.0, %v1617
    %v1619 = vxor.u32 %v1610, 2147483648
    %v1620 = vmul.f32 %v1619, 1.442695
    %v1621 = vpow.pop %v1620
    %v1622 = vadd.f32 %v1621, 1.0
    %v1623 = vrcp.pop %v1622
    %v1624 = vmul.f32 1.0, %v1623
    %v1625 = vtanh.pop %v1611
    %v1626 = vxor.u32 %v1612, 2147483648
    %v1627 = vmul.f32 %v1626, 1.442695
    %v1628 = vpow.pop %v1627
    %v1629 = vadd.f32 %v1628, 1.0
    %v1630 = vrcp.pop %v1629
    %v1631 = vmul.f32 1.0, %v1630
    %v1632 = vmul.f32 %v1624, %v1464
    %v1633 = vmul.f32 %v1618, %v1625
    %v1634 = vadd.f32 %v1632, %v1633
    %v1635 = vtanh.pop %v1634
    %v1636 = vmul.f32 %v1631, %v1635
    %1637 = vmatprep.subr.mxu0 %v384
    %1638 = vmatpush1.msra.mxu0 %v383
    %1639 = vmatprep.subr.mxu0 %v388
    %1640 = vmatpush1.msra.mxu0 %v387
    %1641 = vmatprep.subr.mxu0 %v392
    %1642 = vmatpush1.msra.mxu0 %v391
    %1643 = vmatprep.subr.mxu0 %v396
    %1644 = vmatpush1.msra.mxu0 %v395
    %1645 = vmatprep.subr.mxu0 %v400
    %1646 = vmatpush1.msra.mxu0 %v399
    %1647 = vmatprep.subr.mxu0 %v404
    %1648 = vmatpush1.msra.mxu0 %v403
    %1649 = vmatprep.subr.mxu0 %v408
    %1650 = vmatpush1.msra.mxu0 %v407
    %1651 = vmatprep.subr.mxu0 %v412
    %1652 = vmatpush1.msra.mxu0 %v411
    %1653 = vmatprep.subr.mxu0 %v416
    %1654 = vmatpush1.msra.mxu0 %v415
    %1655 = vmatprep.subr.mxu0 %v420
    %1656 = vmatpush1.msra.mxu0 %v419
    %1657 = vmatprep.subr.mxu0 %v424
    %1658 = vmatpush1.msra.mxu0 %v423
    %1659 = vmatprep.subr.mxu0 %v428
    %1660 = vmatpush1.msra.mxu0 %v427
    %1661 = vmatprep.subr.mxu0 %v432
    %1662 = vmatpush1.msra.mxu0 %v431
    %1663 = vmatprep.subr.mxu0 %v436
    %1664 = vmatpush1.msra.mxu0 %v435
    %1665 = vmatprep.subr.mxu0 %v440
    %1666 = vmatpush1.msra.mxu0 %v439
    %1667 = vmatprep.subr.mxu0 %v444
    %1668 = vmatpush1.msra.mxu0 %v443
    %1669 = vmatprep.subr.mxu0 0.0
    %1670 = vmatpush1.msra.mxu0 0.0
    %1671 = vmatprep.subr.mxu0 0.0
    %1672 = vmatpush1.msra.mxu0 0.0
    %1673 = vmatprep.subr.mxu0 0.0
    %1674 = vmatpush1.msra.mxu0 0.0
    %1675 = vmatprep.subr.mxu0 0.0
    %1676 = vmatpush1.msra.mxu0 0.0
    %1677 = vmatprep.subr.mxu0 0.0
    %1678 = vmatpush1.msra.mxu0 0.0
    %1679 = vmatprep.subr.mxu0 0.0
    %1680 = vmatpush1.msra.mxu0 0.0
    %1681 = vmatprep.subr.mxu0 0.0
    %1682 = vmatpush1.msra.mxu0 0.0
    %1683 = vmatprep.subr.mxu0 0.0
    %1684 = vmatpush1.msra.mxu0 0.0
    %1685 = vmatprep.subr.mxu0 0.0
    %1686 = vmatpush1.msra.mxu0 0.0
    %1687 = vmatprep.subr.mxu0 0.0
    %1688 = vmatpush1.msra.mxu0 0.0
    %1689 = vmatprep.subr.mxu0 0.0
    %1690 = vmatpush1.msra.mxu0 0.0
    %1691 = vmatprep.subr.mxu0 0.0
    %1692 = vmatpush1.msra.mxu0 0.0
    %1693 = vmatprep.subr.mxu0 0.0
    %1694 = vmatpush1.msra.mxu0 0.0
    %1695 = vmatprep.subr.mxu0 0.0
    %1696 = vmatpush1.msra.mxu0 0.0
    %1697 = vmatprep.subr.mxu0 0.0
    %1698 = vmatpush1.msra.mxu0 0.0
    %1699 = vmatprep.subr.mxu0 0.0
    %1700 = vmatpush1.msra.mxu0 0.0
    %1701 = vmatprep.mubr.f32.mxu0 0.0
    %1702 = vmatmul.mubr.f32.gmra.mrb[0].mxu0 %v1636
    %v1703 = vpop.f32.mrb[0].mxu0
    %v1704 = vadd.f32 0.0, %v1703
    %v1705 = vpop.f32.mrb[0].mxu0
    %v1706 = vadd.f32 0.0, %v1705
    %1707 = vdwg.mxu0
    %1708 = vmatprep.subr.mxu0 %v386
    %1709 = vmatpush1.msra.mxu0 %v385
    %1710 = vmatprep.subr.mxu0 %v390
    %1711 = vmatpush1.msra.mxu0 %v389
    %1712 = vmatprep.subr.mxu0 %v394
    %1713 = vmatpush1.msra.mxu0 %v393
    %1714 = vmatprep.subr.mxu0 %v398
    %1715 = vmatpush1.msra.mxu0 %v397
    %1716 = vmatprep.subr.mxu0 %v402
    %1717 = vmatpush1.msra.mxu0 %v401
    %1718 = vmatprep.subr.mxu0 %v406
    %1719 = vmatpush1.msra.mxu0 %v405
    %1720 = vmatprep.subr.mxu0 %v410
    %1721 = vmatpush1.msra.mxu0 %v409
    %1722 = vmatprep.subr.mxu0 %v414
    %1723 = vmatpush1.msra.mxu0 %v413
    %1724 = vmatprep.subr.mxu0 %v418
    %1725 = vmatpush1.msra.mxu0 %v417
    %1726 = vmatprep.subr.mxu0 %v422
    %1727 = vmatpush1.msra.mxu0 %v421
    %1728 = vmatprep.subr.mxu0 %v426
    %1729 = vmatpush1.msra.mxu0 %v425
    %1730 = vmatprep.subr.mxu0 %v430
    %1731 = vmatpush1.msra.mxu0 %v429
    %1732 = vmatprep.subr.mxu0 %v434
    %1733 = vmatpush1.msra.mxu0 %v433
    %1734 = vmatprep.subr.mxu0 %v438
    %1735 = vmatpush1.msra.mxu0 %v437
    %1736 = vmatprep.subr.mxu0 %v442
    %1737 = vmatpush1.msra.mxu0 %v441
    %1738 = vmatprep.subr.mxu0 %v446
    %1739 = vmatpush1.msra.mxu0 %v445
    %1740 = vmatprep.subr.mxu0 0.0
    %1741 = vmatpush1.msra.mxu0 0.0
    %1742 = vmatprep.subr.mxu0 0.0
    %1743 = vmatpush1.msra.mxu0 0.0
    %1744 = vmatprep.subr.mxu0 0.0
    %1745 = vmatpush1.msra.mxu0 0.0
    %1746 = vmatprep.subr.mxu0 0.0
    %1747 = vmatpush1.msra.mxu0 0.0
    %1748 = vmatprep.subr.mxu0 0.0
    %1749 = vmatpush1.msra.mxu0 0.0
    %1750 = vmatprep.subr.mxu0 0.0
    %1751 = vmatpush1.msra.mxu0 0.0
    %1752 = vmatprep.subr.mxu0 0.0
    %1753 = vmatpush1.msra.mxu0 0.0
    %1754 = vmatprep.subr.mxu0 0.0
    %1755 = vmatpush1.msra.mxu0 0.0
    %1756 = vmatprep.subr.mxu0 0.0
    %1757 = vmatpush1.msra.mxu0 0.0
    %1758 = vmatprep.subr.mxu0 0.0
    %1759 = vmatpush1.msra.mxu0 0.0
    %1760 = vmatprep.subr.mxu0 0.0
    %1761 = vmatpush1.msra.mxu0 0.0
    %1762 = vmatprep.subr.mxu0 0.0
    %1763 = vmatpush1.msra.mxu0 0.0
    %1764 = vmatprep.subr.mxu0 0.0
    %1765 = vmatpush1.msra.mxu0 0.0
    %1766 = vmatprep.subr.mxu0 0.0
    %1767 = vmatpush1.msra.mxu0 0.0
    %1768 = vmatprep.subr.mxu0 0.0
    %1769 = vmatpush1.msra.mxu0 0.0
    %1770 = vmatprep.subr.mxu0 0.0
    %1771 = vmatpush1.msra.mxu0 0.0
    %1772 = vmatprep.mubr.f32.mxu0 0.0
    %1773 = vmatmul.mubr.f32.gmra.mrb[0].mxu0 %v1636
    %v1774 = vpop.f32.mrb[0].mxu0
    %v1775 = vadd.f32 0.0, %v1774
    %v1776 = vpop.f32.mrb[0].mxu0
    %v1777 = vadd.f32 0.0, %v1776
    %1778 = vdwg.mxu0
    %v1779 = vadd.f32 %v266, %v1704
    %v1780 = vadd.f32 %v268, %v1706
    %v1781 = vadd.f32 %v379, %v1775
    %v1782 = vadd.f32 %v381, %v1777
    %v1783 = vxor.u32 %v1779, 2147483648
    %v1784 = vmul.f32 %v1783, 1.442695
    %v1785 = vpow.pop %v1784
    %v1786 = vadd.f32 %v1785, 1.0
    %v1787 = vrcp.pop %v1786
    %v1788 = vmul.f32 1.0, %v1787
    %v1789 = vxor.u32 %v1780, 2147483648
    %v1790 = vmul.f32 %v1789, 1.442695
    %v1791 = vpow.pop %v1790
    %v1792 = vadd.f32 %v1791, 1.0
    %v1793 = vrcp.pop %v1792
    %v1794 = vmul.f32 1.0, %v1793
    %v1795 = vtanh.pop %v1781
    %v1796 = vxor.u32 %v1782, 2147483648
    %v1797 = vmul.f32 %v1796, 1.442695
    %v1798 = vpow.pop %v1797
    %v1799 = vadd.f32 %v1798, 1.0
    %v1800 = vrcp.pop %v1799
    %v1801 = vmul.f32 1.0, %v1800
    %v1802 = vmul.f32 %v1794, %v1634
    %v1803 = vmul.f32 %v1788, %v1795
    %v1804 = vadd.f32 %v1802, %v1803
    %v1805 = vtanh.pop %v1804
    %v1806 = vmul.f32 %v1801, %v1805
    %v1807 = vld [vmem:[#allocation7] sm:$0xff]
    %v1808 = vld [vmem:[#allocation7 + $0x8] sm:$0xff]
    %v1809 = vld [vmem:[#allocation7 + $0x10] sm:$0xff]
    %v1810 = vld [vmem:[#allocation7 + $0x18] sm:$0xff]
    %v1811 = vld [vmem:[#allocation7 + $0x20] sm:$0xff]
    %v1812 = vld [vmem:[#allocation7 + $0x28] sm:$0xff]
    %v1813 = vld [vmem:[#allocation7 + $0x30] sm:$0xff]
    %v1814 = vld [vmem:[#allocation7 + $0x38] sm:$0xff]
    %v1815 = vld [vmem:[#allocation7 + $0x40] sm:$0xff]
    %v1816 = vld [vmem:[#allocation7 + $0x48] sm:$0xff]
    %v1817 = vld [vmem:[#allocation7 + $0x50] sm:$0xff]
    %v1818 = vld [vmem:[#allocation7 + $0x58] sm:$0xff]
    %v1819 = vld [vmem:[#allocation7 + $0x60] sm:$0xff]
    %v1820 = vld [vmem:[#allocation7 + $0x68] sm:$0xff]
    %v1821 = vld [vmem:[#allocation7 + $0x70] sm:$0xff]
    %v1822 = vld [vmem:[#allocation7 + $0x78] sm:$0xff]
    %v1823 = vld [vmem:[%s5] sm:$0x1]
    %v1825 = vlaneseq
    %v1826 = vshrl.u32 %v1825, 7
    %v1827 = vsub.s32 0, %v1826
    %v1828 = vrot.slane %v1823, %v1827
    %1830 = vmatprep.subr.mxu0 0.0
    %1831 = vmatpush1.msra.mxu0 %v1807
    %1832 = vmatprep.subr.mxu0 0.0
    %1833 = vmatpush1.msra.mxu0 %v1808
    %1834 = vmatprep.subr.mxu0 0.0
    %1835 = vmatpush1.msra.mxu0 %v1809
    %1836 = vmatprep.subr.mxu0 0.0
    %1837 = vmatpush1.msra.mxu0 %v1810
    %1838 = vmatprep.subr.mxu0 0.0
    %1839 = vmatpush1.msra.mxu0 %v1811
    %1840 = vmatprep.subr.mxu0 0.0
    %1841 = vmatpush1.msra.mxu0 %v1812
    %1842 = vmatprep.subr.mxu0 0.0
    %1843 = vmatpush1.msra.mxu0 %v1813
    %1844 = vmatprep.subr.mxu0 0.0
    %1845 = vmatpush1.msra.mxu0 %v1814
    %1846 = vmatprep.subr.mxu0 0.0
    %1847 = vmatpush1.msra.mxu0 %v1815
    %1848 = vmatprep.subr.mxu0 0.0
    %1849 = vmatpush1.msra.mxu0 %v1816
    %1850 = vmatprep.subr.mxu0 0.0
    %1851 = vmatpush1.msra.mxu0 %v1817
    %1852 = vmatprep.subr.mxu0 0.0
    %1853 = vmatpush1.msra.mxu0 %v1818
    %1854 = vmatprep.subr.mxu0 0.0
    %1855 = vmatpush1.msra.mxu0 %v1819
    %1856 = vmatprep.subr.mxu0 0.0
    %1857 = vmatpush1.msra.mxu0 %v1820
    %1858 = vmatprep.subr.mxu0 0.0
    %1859 = vmatpush1.msra.mxu0 %v1821
    %1860 = vmatprep.subr.mxu0 0.0
    %1861 = vmatpush1.msra.mxu0 %v1822
    %1862 = vmatprep.subr.mxu0 0.0
    %1863 = vmatpush1.msra.mxu0 0.0
    %1864 = vmatprep.subr.mxu0 0.0
    %1865 = vmatpush1.msra.mxu0 0.0
    %1866 = vmatprep.subr.mxu0 0.0
    %1867 = vmatpush1.msra.mxu0 0.0
    %1868 = vmatprep.subr.mxu0 0.0
    %1869 = vmatpush1.msra.mxu0 0.0
    %1870 = vmatprep.subr.mxu0 0.0
    %1871 = vmatpush1.msra.mxu0 0.0
    %1872 = vmatprep.subr.mxu0 0.0
    %1873 = vmatpush1.msra.mxu0 0.0
    %1874 = vmatprep.subr.mxu0 0.0
    %1875 = vmatpush1.msra.mxu0 0.0
    %1876 = vmatprep.subr.mxu0 0.0
    %1877 = vmatpush1.msra.mxu0 0.0
    %1878 = vmatprep.subr.mxu0 0.0
    %1879 = vmatpush1.msra.mxu0 0.0
    %1880 = vmatprep.subr.mxu0 0.0
    %1881 = vmatpush1.msra.mxu0 0.0
    %1882 = vmatprep.subr.mxu0 0.0
    %1883 = vmatpush1.msra.mxu0 0.0
    %1884 = vmatprep.subr.mxu0 0.0
    %1885 = vmatpush1.msra.mxu0 0.0
    %1886 = vmatprep.subr.mxu0 0.0
    %1887 = vmatpush1.msra.mxu0 0.0
    %1888 = vmatprep.subr.mxu0 0.0
    %1889 = vmatpush1.msra.mxu0 0.0
    %1890 = vmatprep.subr.mxu0 0.0
    %1891 = vmatpush1.msra.mxu0 0.0
    %1892 = vmatprep.subr.mxu0 0.0
    %1893 = vmatpush1.msra.mxu0 0.0
    %1894 = vmatprep.mubr.f32.mxu0 0.0
    %1895 = vmatmul.mubr.f32.gmra.mrb[0].mxu0 %v1806
    %v1896 = vpop.f32.mrb[0].mxu0
    %v1897 = vadd.f32 %v1828, %v1896
    %v1898 = vpop.f32.mrb[0].mxu0
    %1899 = vdwg.mxu0
    %v1900 = vmax.f32 %v1897, 0.0
    %v1901 = vld [vmem:[%s6] sm:$0xff]
    %v1902 = vld [vmem:[%s6 + $0x8] sm:$0xff]
    %v1903 = vld [vmem:[%s6 + $0x10] sm:$0xff]
    %v1904 = vld [vmem:[%s6 + $0x18] sm:$0xff]
    %v1905 = vld [vmem:[%s6 + $0x20] sm:$0xff]
    %v1906 = vld [vmem:[%s7] sm:$0x1]
    %v1908 = vlaneseq
    %v1909 = vshrl.u32 %v1908, 7
    %v1910 = vsub.s32 0, %v1909
    %v1911 = vrot.slane %v1906, %v1910
    %vm1913 = vcmask 326656
    %v1915 = vsel %vm1913, %v1900, 0
    %1917 = vmatprep.subr.mxu0 0.0
    %1918 = vmatpush1.msra.mxu0 %v1901
    %1919 = vmatprep.subr.mxu0 0.0
    %1920 = vmatpush1.msra.mxu0 %v1902
    %1921 = vmatprep.subr.mxu0 0.0
    %1922 = vmatpush1.msra.mxu0 %v1903
    %1923 = vmatprep.subr.mxu0 0.0
    %1924 = vmatpush1.msra.mxu0 %v1904
    %1925 = vmatprep.subr.mxu0 0.0
    %1926 = vmatpush1.msra.mxu0 %v1905
    %1927 = vmatprep.subr.mxu0 0.0
    %1928 = vmatpush1.msra.mxu0 0.0
    %1929 = vmatprep.subr.mxu0 0.0
    %1930 = vmatpush1.msra.mxu0 0.0
    %1931 = vmatprep.subr.mxu0 0.0
    %1932 = vmatpush1.msra.mxu0 0.0
    %1933 = vmatprep.subr.mxu0 0.0
    %1934 = vmatpush1.msra.mxu0 0.0
    %1935 = vmatprep.subr.mxu0 0.0
    %1936 = vmatpush1.msra.mxu0 0.0
    %1937 = vmatprep.subr.mxu0 0.0
    %1938 = vmatpush1.msra.mxu0 0.0
    %1939 = vmatprep.subr.mxu0 0.0
    %1940 = vmatpush1.msra.mxu0 0.0
    %1941 = vmatprep.subr.mxu0 0.0
    %1942 = vmatpush1.msra.mxu0 0.0
    %1943 = vmatprep.subr.mxu0 0.0
    %1944 = vmatpush1.msra.mxu0 0.0
    %1945 = vmatprep.subr.mxu0 0.0
    %1946 = vmatpush1.msra.mxu0 0.0
    %1947 = vmatprep.subr.mxu0 0.0
    %1948 = vmatpush1.msra.mxu0 0.0
    %1949 = vmatprep.subr.mxu0 0.0
    %1950 = vmatpush1.msra.mxu0 0.0
    %1951 = vmatprep.subr.mxu0 0.0
    %1952 = vmatpush1.msra.mxu0 0.0
    %1953 = vmatprep.subr.mxu0 0.0
    %1954 = vmatpush1.msra.mxu0 0.0
    %1955 = vmatprep.subr.mxu0 0.0
    %1956 = vmatpush1.msra.mxu0 0.0
    %1957 = vmatprep.subr.mxu0 0.0
    %1958 = vmatpush1.msra.mxu0 0.0
    %1959 = vmatprep.subr.mxu0 0.0
    %1960 = vmatpush1.msra.mxu0 0.0
    %1961 = vmatprep.subr.mxu0 0.0
    %1962 = vmatpush1.msra.mxu0 0.0
    %1963 = vmatprep.subr.mxu0 0.0
    %1964 = vmatpush1.msra.mxu0 0.0
    %1965 = vmatprep.subr.mxu0 0.0
    %1966 = vmatpush1.msra.mxu0 0.0
    %1967 = vmatprep.subr.mxu0 0.0
    %1968 = vmatpush1.msra.mxu0 0.0
    %1969 = vmatprep.subr.mxu0 0.0
    %1970 = vmatpush1.msra.mxu0 0.0
    %1971 = vmatprep.subr.mxu0 0.0
    %1972 = vmatpush1.msra.mxu0 0.0
    %1973 = vmatprep.subr.mxu0 0.0
    %1974 = vmatpush1.msra.mxu0 0.0
    %1975 = vmatprep.subr.mxu0 0.0
    %1976 = vmatpush1.msra.mxu0 0.0
    %1977 = vmatprep.subr.mxu0 0.0
    %1978 = vmatpush1.msra.mxu0 0.0
    %1979 = vmatprep.subr.mxu0 0.0
    %1980 = vmatpush1.msra.mxu0 0.0
    %1981 = vmatprep.mubr.f32.mxu0 0.0
    %1982 = vmatmul.mubr.f32.gmra.mrb[0].mxu0 %v1915
    %v1983 = vpop.f32.mrb[0].mxu0
    %v1984 = vadd.f32 %v1911, %v1983
    %v1985 = vpop.f32.mrb[0].mxu0
    %1986 = vdwg.mxu0
    %vm1987 = vcmask 25600
    %1988 = vst.msk [vmem:[#allocation8] sm:$0x3] %vm1987, %v1984
    // Predicated region
    $region46: #{ef_lf_rnn_forward.1} parent=1 // pred_check
      _
    $region47: #{ef_lf_rnn_forward.1} parent=1 // pred_check_branch
      %1990 = sbr.rel (0) target = $region49
    $region48: #{ef_lf_rnn_forward.1} parent=1 // pred_region
      %s1992 = ssub.s32 32, 32
      %1993 = vsyncadd [#allocation4], %s1992
      %s1995 = sshll.u32 [#allocation8], 4
      %s1996 = int_to_ptr.vmem [resolvable:$true] %s1995
      %1998 = dma.vmem_to_hbm [thread:$0]  %s1996, 32, %s8, [#allocation4]
    $region49: #{ef_lf_rnn_forward.1} parent=1 // pred_fallthru
      _
    // Predicated region
    $region50: #{ef_lf_rnn_forward.1} parent=1 // pred_check
      _
    $region51: #{ef_lf_rnn_forward.1} parent=1 // pred_check_branch
      %2000 = sbr.rel (0) target = $region53
    $region52: #{ef_lf_rnn_forward.1} parent=1 // pred_region
      %2001 = dma.done [#allocation4], 32
    $region53: #{ef_lf_rnn_forward.1} parent=1 // pred_fallthru
      _
    %2002 = vsyncpa [#allocation3], 1
    %2003 = vsyncpa [#allocation6], 1
    %2004 = vsyncpa [#allocation4], 1

</llo_original>
